<compile_context>
chip_gen: v7x
topology: tpu7x:2x2x1
jax: 0.10.0
libtpu: 0.0.40
codegen_flags: <defaults>
</compile_context>

<pallas_src>
import jax
import jax.numpy as jnp
from jax import lax
from jax.experimental import pallas as pl
from jax.experimental.pallas import tpu as pltpu

# --- small synthetic-BERT config ---
VOCAB = 64
SEQ = 8
HIDDEN = 32
N_HEADS = 2
HEAD_DIM = HIDDEN // N_HEADS
FFN = 64
NUM_CLASSES = 3
PAD_CLASSES = 128     # lane-dense padded classifier width
BATCH = 2
BS = BATCH * SEQ

# --- vector slab row offsets (packer and kernel must agree) ---
_R_POS = 0                      # BS rows: pos_emb tiled over batch
_R_SEG = BS                     # 2 rows:  seg_emb
_R_LNE_G = _R_SEG + 2
_R_LNE_B = _R_LNE_G + 1
_R_BO = _R_LNE_B + 1
_R_LN1_G = _R_BO + 1
_R_LN1_B = _R_LN1_G + 1
_R_B2 = _R_LN1_B + 1
_R_LN2_G = _R_B2 + 1
_R_LN2_B = _R_LN2_G + 1
_R_BP = _R_LN2_B + 1
_R_BQKV = _R_BP + 1             # lanes 0:3H
_R_B1 = _R_BQKV + 1             # lanes 0:FFN
_R_BC = _R_B1 + 1               # lanes 0:PAD_CLASSES
_VEC_ROWS = _R_BC + 1           # 30

# --- matrix slab lane offsets ---
_C_WQKV = 0
_C_WO = _C_WQKV + 3 * HIDDEN    # 96
_C_WC = _C_WO + HIDDEN          # 128 (128-aligned for the widest item)
_C_WP = _C_WC + PAD_CLASSES     # 256
_C_W1 = _C_WP + HIDDEN          # 288
_MATH_COLS = _C_W1 + FFN        # 352


def _layernorm(x, g, b, eps=1e-12):
    mu = jnp.mean(x, axis=-1, keepdims=True)
    var = jnp.mean((x - mu) ** 2, axis=-1, keepdims=True)
    return (x - mu) * lax.rsqrt(var + eps) * g + b


def _gelu(x):
    c = jnp.float32(0.7978845608028654)  # sqrt(2/pi)
    return 0.5 * x * (1.0 + jnp.tanh(c * (x + 0.044715 * x * x * x)))


def bert_classifier_kernel(
    valid_len_ref,                 # scalar prefetch, SMEM [B] int32
    ids_ref,                       # [BS, 2] int32: col 0 = token id, col 1 = segment id
    tokw2_ref,                     # [VOCAB, 2H]: tok_emb | w2
    matH_ref,                      # [H, _MATH_COLS]: wqkv | wo | wc_pad | wp | w1
    vec_ref,                       # [_VEC_ROWS, 128]: pos/seg/LN/bias row slab
    logits_ref,                    # [B, PAD_CLASSES] float32
):
    S, H, dH, V = SEQ, HIDDEN, HEAD_DIM, VOCAB

    ids = ids_ref[...]
    tok = ids[:, 0:1]              # [BS, 1] int32
    seg = ids[:, 1:2]              # [BS, 1] int32

    vec = vec_ref[...]             # [_VEC_ROWS, 128]
    pos = vec[_R_POS:_R_POS + BS, 0:H]            # [BS, H] (already tiled over batch)
    seg0 = vec[_R_SEG:_R_SEG + 1, 0:H]
    seg1 = vec[_R_SEG + 1:_R_SEG + 2, 0:H]
    ln_e_g = vec[_R_LNE_G:_R_LNE_G + 1, 0:H]
    ln_e_b = vec[_R_LNE_B:_R_LNE_B + 1, 0:H]
    bo = vec[_R_BO:_R_BO + 1, 0:H]
    ln1_g = vec[_R_LN1_G:_R_LN1_G + 1, 0:H]
    ln1_b = vec[_R_LN1_B:_R_LN1_B + 1, 0:H]
    b2 = vec[_R_B2:_R_B2 + 1, 0:H]
    ln2_g = vec[_R_LN2_G:_R_LN2_G + 1, 0:H]
    ln2_b = vec[_R_LN2_B:_R_LN2_B + 1, 0:H]
    bp = vec[_R_BP:_R_BP + 1, 0:H]
    bqkv = vec[_R_BQKV:_R_BQKV + 1, 0:3 * H]
    b1 = vec[_R_B1:_R_B1 + 1, 0:FFN]
    bc = vec[_R_BC:_R_BC + 1, :]                  # [1, PAD_CLASSES]

    tokw2 = tokw2_ref[...]
    tok_emb = tokw2[:, 0:H]        # [V, H]
    w2 = tokw2[:, H:2 * H]         # [FFN, H]

    matH = matH_ref[...]
    wqkv = matH[:, _C_WQKV:_C_WQKV + 3 * H]
    wo = matH[:, _C_WO:_C_WO + H]
    wc = matH[:, _C_WC:_C_WC + PAD_CLASSES]
    wp = matH[:, _C_WP:_C_WP + H]
    w1 = matH[:, _C_W1:_C_W1 + FFN]

    # gen_attention_mask, folded over batch: key (row r, col c) valid iff r and c are in the
    # same batch block AND c is within that batch's valid_length. Invalid -> -1e9 so exp()
    # underflows to exactly 0 and the per-batch softmax is exact.
    row = lax.broadcasted_iota(jnp.int32, (BS, BS), 0)
    col = lax.broadcasted_iota(jnp.int32, (BS, BS), 1)
    valid = jnp.zeros((BS, BS), jnp.bool_)
    for bi in range(BATCH):        # static unroll, no integer division
        vlen = valid_len_ref[bi]   # int32 scalar from SMEM
        blk = ((row >= bi * S) & (row < (bi + 1) * S)
               & (col >= bi * S) & (col < bi * S + vlen))
        valid = valid | blk
    neg = jnp.where(valid, jnp.float32(0.0), jnp.float32(-1e9))          # [BS, BS]

    # --- embeddings ---
    onehot_tok = (tok == lax.broadcasted_iota(jnp.int32, (BS, V), 1)).astype(jnp.float32)
    x = jnp.dot(onehot_tok, tok_emb, preferred_element_type=jnp.float32)  # [BS, H]
    # segment embedding: 2-way VPU select (segment ids are in {0, 1})
    x = x + jnp.where(seg == 0, seg0, seg1)
    x = x + pos
    x = _layernorm(x, ln_e_g, ln_e_b)

    # --- multi-head self-attention (single fused QKV matmul for the whole batch) ---
    qkv = jnp.dot(x, wqkv, preferred_element_type=jnp.float32) + bqkv     # [BS, 3H]
    scale = jnp.float32(1.0 / (dH ** 0.5))
    ctx_heads = []
    for h in range(N_HEADS):       # static unroll over heads
        qh = qkv[:, h * dH:(h + 1) * dH]                       # [BS, dH]
        kh = qkv[:, H + h * dH:H + (h + 1) * dH]               # [BS, dH]
        vh = qkv[:, 2 * H + h * dH:2 * H + (h + 1) * dH]       # [BS, dH]
        s = lax.dot_general(qh, kh, (((1,), (1,)), ((), ())),
                            preferred_element_type=jnp.float32) * scale + neg   # [BS, BS]
        s = s - jnp.max(s, axis=-1, keepdims=True)
        p = jnp.exp(s)
        p = p * pl.reciprocal(jnp.sum(p, axis=-1, keepdims=True), approx=False)
        ctx_heads.append(jnp.dot(p, vh, preferred_element_type=jnp.float32))    # [BS, dH]
    ctx = jnp.concatenate(ctx_heads, axis=-1)                               # [BS, H]
    attn = jnp.dot(ctx, wo, preferred_element_type=jnp.float32) + bo        # single Wo matmul
    x = _layernorm(x + attn, ln1_g, ln1_b)

    # --- CLS rows only: FFN, residual, ln2, pooler, classifier (row-wise ops) ---
    cls = jnp.concatenate([x[b * S:b * S + 1, :] for b in range(BATCH)], axis=0)  # [B, H]
    ff = _gelu(jnp.dot(cls, w1, preferred_element_type=jnp.float32) + b1)
    ff = jnp.dot(ff, w2, preferred_element_type=jnp.float32) + b2
    cls = _layernorm(cls + ff, ln2_g, ln2_b)
    pooler = jnp.tanh(jnp.dot(cls, wp, preferred_element_type=jnp.float32) + bp)  # [B, H]

    # classifier: lane-dense [B, 128] store (sliced to NUM_CLASSES in the wrapper)
    logits = jnp.dot(pooler, wc, preferred_element_type=jnp.float32) + bc
    logits_ref[...] = logits


def pack_params(params):
    """Done ONCE outside the hot path: pack the many tiny weights into 3 DMA slabs."""
    (tok_emb, seg_emb, pos_emb, ln_e_g, ln_e_b,
     wq, bq, wk, bk, wv, bv, wo, bo, ln1_g, ln1_b,
     w1, b1, w2, b2, ln2_g, ln2_b, wp, bp, wc, bc) = params
    f32 = jnp.float32

    wqkv = jnp.concatenate([wq, wk, wv], axis=1)                    # [H, 3H]
    bqkv = jnp.concatenate([bq, bk, bv], axis=1)                    # [1, 3H]
    wc_pad = jnp.zeros((HIDDEN, PAD_CLASSES), f32).at[:, :NUM_CLASSES].set(wc)
    bc_pad = jnp.zeros((1, PAD_CLASSES), f32).at[:, :NUM_CLASSES].set(bc)

    # matrix slab: [H, 352] = wqkv | wo | wc_pad | wp | w1 (lane offsets in _C_*)
    matH = jnp.concatenate([wqkv, wo, wc_pad, wp, w1], axis=1)
    assert matH.shape == (HIDDEN, _MATH_COLS)

    # tok_emb and w2 share the 64-row sublane extent -> one [64, 64] slab
    tokw2 = jnp.concatenate([tok_emb, w2], axis=1)

    # vector slab [_VEC_ROWS, 128]: each row zero-padded to 128 lanes
    def rowpad(v):
        out = jnp.zeros((v.shape[0], PAD_CLASSES), f32)
        return out.at[:, :v.shape[1]].set(v)

    vec = jnp.concatenate([
        rowpad(jnp.tile(pos_emb, (BATCH, 1))),    # rows 0..BS-1
        rowpad(seg_emb),                          # rows BS, BS+1
        rowpad(ln_e_g), rowpad(ln_e_b), rowpad(bo),
        rowpad(ln1_g), rowpad(ln1_b), rowpad(b2),
        rowpad(ln2_g), rowpad(ln2_b), rowpad(bp),
        rowpad(bqkv), rowpad(b1), rowpad(bc_pad),
    ], axis=0)
    assert vec.shape == (_VEC_ROWS, PAD_CLASSES)
    return tokw2, matH, vec


@jax.jit
def bert_classifier(token_ids, valid_length, segment_ids, packed):
    tokw2, matH, vec = packed
    B, S = token_ids.shape
    assert (B, S) == (BATCH, SEQ)

    ids = jnp.stack([token_ids.astype(jnp.int32).reshape(BS),
                     segment_ids.astype(jnp.int32).reshape(BS)], axis=1)   # [BS, 2]
    vlen = valid_length.reshape(-1).astype(jnp.int32)                      # [B] (SMEM prefetch)

    grid_spec = pltpu.PrefetchScalarGridSpec(
        num_scalar_prefetch=1,
        grid=(1,),                                   # whole batch in one kernel step
        in_specs=[
            pl.BlockSpec((BS, 2), lambda i, vl: (0, 0)),
            pl.BlockSpec(tokw2.shape, lambda i, vl: (0, 0)),
            pl.BlockSpec(matH.shape, lambda i, vl: (0, 0)),
            pl.BlockSpec(vec.shape, lambda i, vl: (0, 0)),
        ],
        out_specs=pl.BlockSpec((B, PAD_CLASSES), lambda i, vl: (0, 0)),
    )

    out = pl.pallas_call(
        bert_classifier_kernel,
        out_shape=jax.ShapeDtypeStruct((B, PAD_CLASSES), jnp.float32),
        grid_spec=grid_spec,
        compiler_params=pltpu.CompilerParams(dimension_semantics=("arbitrary",)),
    )(vlen, ids, tokw2, matH, vec)

    return out[:, :NUM_CLASSES]


def init_params(key):
    ks = jax.random.split(key, 12)
    s = 0.02
    f32 = jnp.float32
    tok_emb = jax.random.normal(ks[0], (VOCAB, HIDDEN), f32) * s
    seg_emb = jax.random.normal(ks[1], (2, HIDDEN), f32) * s
    pos_emb = jax.random.normal(ks[2], (SEQ, HIDDEN), f32) * s
    ln_e_g = jnp.ones((1, HIDDEN), f32); ln_e_b = jnp.zeros((1, HIDDEN), f32)
    wq = jax.random.normal(ks[3], (HIDDEN, HIDDEN), f32) * s; bq = jnp.zeros((1, HIDDEN), f32)
    wk = jax.random.normal(ks[4], (HIDDEN, HIDDEN), f32) * s; bk = jnp.zeros((1, HIDDEN), f32)
    wv = jax.random.normal(ks[5], (HIDDEN, HIDDEN), f32) * s; bv = jnp.zeros((1, HIDDEN), f32)
    wo = jax.random.normal(ks[6], (HIDDEN, HIDDEN), f32) * s; bo = jnp.zeros((1, HIDDEN), f32)
    ln1_g = jnp.ones((1, HIDDEN), f32); ln1_b = jnp.zeros((1, HIDDEN), f32)
    w1 = jax.random.normal(ks[7], (HIDDEN, FFN), f32) * s; b1 = jnp.zeros((1, FFN), f32)
    w2 = jax.random.normal(ks[8], (FFN, HIDDEN), f32) * s; b2 = jnp.zeros((1, HIDDEN), f32)
    ln2_g = jnp.ones((1, HIDDEN), f32); ln2_b = jnp.zeros((1, HIDDEN), f32)
    wp = jax.random.normal(ks[9], (HIDDEN, HIDDEN), f32) * s; bp = jnp.zeros((1, HIDDEN), f32)
    wc = jax.random.normal(ks[10], (HIDDEN, NUM_CLASSES), f32) * s
    bc = jnp.zeros((1, NUM_CLASSES), f32)
    return (tok_emb, seg_emb, pos_emb, ln_e_g, ln_e_b,
            wq, bq, wk, bk, wv, bv, wo, bo, ln1_g, ln1_b,
            w1, b1, w2, b2, ln2_g, ln2_b, wp, bp, wc, bc)


def reference(token_ids, valid_length, segment_ids, params):
    (tok_emb, seg_emb, pos_emb, ln_e_g, ln_e_b,
     wq, bq, wk, bk, wv, bv, wo, bo, ln1_g, ln1_b,
     w1, b1, w2, b2, ln2_g, ln2_b, wp, bp, wc, bc) = params
    B, S = token_ids.shape
    H = HIDDEN
    dH = HEAD_DIM
    col = jnp.arange(S, dtype=jnp.int32)[None, :]
    mask = (col < valid_length.reshape(B, 1)).astype(jnp.float32)
    x = tok_emb[token_ids.reshape(-1)] + seg_emb[segment_ids.reshape(-1)]
    x = x.reshape(B, S, H) + pos_emb[None]
    x = x.reshape(B * S, H)
    x = _layernorm(x, ln_e_g, ln_e_b)
    q = x @ wq + bq; k = x @ wk + bk; v = x @ wv + bv
    neg = (mask[:, None, :] - 1.0) * 1e9
    ctxs = []
    for h in range(N_HEADS):
        qh = q[:, h * dH:(h + 1) * dH].reshape(B, S, dH)
        kh = k[:, h * dH:(h + 1) * dH].reshape(B, S, dH)
        vh = v[:, h * dH:(h + 1) * dH].reshape(B, S, dH)
        s = jnp.einsum('bqd,bkd->bqk', qh, kh) / jnp.sqrt(jnp.float32(dH)) + neg
        p = jax.nn.softmax(s, axis=-1)
        ctxs.append(jnp.einsum('bqk,bkd->bqd', p, vh))
    ctx = jnp.concatenate(ctxs, axis=-1).reshape(B * S, H)
    x = _layernorm(x + ctx @ wo + bo, ln1_g, ln1_b)
    ff = _gelu(x @ w1 + b1) @ w2 + b2
    x = _layernorm(x + ff, ln2_g, ln2_b)
    cls = x.reshape(B, S, H)[:, 0, :]
    pooler = jnp.tanh(cls @ wp + bp)
    return pooler @ wc + bc


if __name__ == "__main__":
    key = jax.random.PRNGKey(0)
    k_tok, k_param = jax.random.split(key)
    token_ids = jax.random.randint(k_tok, (BATCH, SEQ), 0, VOCAB, dtype=jnp.int32)
    valid_length = jnp.array([SEQ, 5], dtype=jnp.int32)
    segment_ids = jnp.zeros((BATCH, SEQ), dtype=jnp.int32)
    params = init_params(k_param)

    packed = pack_params(params)          # weight packing done once, outside the hot path

    logits = bert_classifier(token_ids, valid_length, segment_ids, packed)
    logits = jax.block_until_ready(logits)

    ref = reference(token_ids, valid_length, segment_ids, params)
    assert logits.shape == (BATCH, NUM_CLASSES)
    assert jnp.allclose(logits, ref, atol=1e-4, rtol=1e-4), (logits, ref)
    print("KERNEL_OK")
</pallas_src>

<mosaic_0001>
module attributes {stable_mosaic.version = 11 : i64} {
  func.func @bert_classifier_kernel(%arg0: i32, %arg1: memref<2xi32, #tpu.memory_space<smem>>, %arg2: memref<16x2xi32, #tpu.memory_space<vmem>>, %arg3: memref<64x64xf32, #tpu.memory_space<vmem>>, %arg4: memref<32x352xf32, #tpu.memory_space<vmem>>, %arg5: memref<30x128xf32, #tpu.memory_space<vmem>>, %arg6: memref<2x128xf32, #tpu.memory_space<vmem>>) attributes {dimension_semantics = [#tpu.dimension_semantics<arbitrary>], iteration_bounds = array<i64: 1>, scalar_prefetch = 1 : i64, scratch_operands = 0 : i64, tpu.core_type = #tpu.core_type<tc>, window_params = [{pipeline_mode = #tpu.pipeline_mode<synchronous>, transform_indices = @transform_0, window_bounds = array<i64: 16, 2>}, {pipeline_mode = #tpu.pipeline_mode<synchronous>, transform_indices = @transform_1, window_bounds = array<i64: 64, 64>}, {pipeline_mode = #tpu.pipeline_mode<synchronous>, transform_indices = @transform_2, window_bounds = array<i64: 32, 352>}, {pipeline_mode = #tpu.pipeline_mode<synchronous>, transform_indices = @transform_3, window_bounds = array<i64: 30, 128>}, {pipeline_mode = #tpu.pipeline_mode<synchronous>, transform_indices = @transform_4, window_bounds = array<i64: 2, 128>}]} {
    %c0 = arith.constant 0 : index
    %c0_0 = arith.constant 0 : index
    %0 = vector.load %arg2[%c0, %c0_0] : memref<16x2xi32, #tpu.memory_space<vmem>>, vector<16x2xi32>
    %1 = vector.extract_strided_slice %0 {offsets = [0, 0], sizes = [16, 1], strides = [1, 1]} : vector<16x2xi32> to vector<16x1xi32>
    %2 = vector.extract_strided_slice %0 {offsets = [0, 1], sizes = [16, 1], strides = [1, 1]} : vector<16x2xi32> to vector<16x1xi32>
    %c0_1 = arith.constant 0 : index
    %c0_2 = arith.constant 0 : index
    %3 = vector.load %arg5[%c0_1, %c0_2] : memref<30x128xf32, #tpu.memory_space<vmem>>, vector<30x128xf32>
    %4 = vector.extract_strided_slice %3 {offsets = [0, 0], sizes = [16, 32], strides = [1, 1]} : vector<30x128xf32> to vector<16x32xf32>
    %5 = vector.extract_strided_slice %3 {offsets = [16, 0], sizes = [1, 32], strides = [1, 1]} : vector<30x128xf32> to vector<1x32xf32>
    %6 = vector.extract_strided_slice %3 {offsets = [17, 0], sizes = [1, 32], strides = [1, 1]} : vector<30x128xf32> to vector<1x32xf32>
    %7 = vector.extract_strided_slice %3 {offsets = [18, 0], sizes = [1, 32], strides = [1, 1]} : vector<30x128xf32> to vector<1x32xf32>
    %8 = vector.extract_strided_slice %3 {offsets = [19, 0], sizes = [1, 32], strides = [1, 1]} : vector<30x128xf32> to vector<1x32xf32>
    %9 = vector.extract_strided_slice %3 {offsets = [20, 0], sizes = [1, 32], strides = [1, 1]} : vector<30x128xf32> to vector<1x32xf32>
    %10 = vector.extract_strided_slice %3 {offsets = [21, 0], sizes = [1, 32], strides = [1, 1]} : vector<30x128xf32> to vector<1x32xf32>
    %11 = vector.extract_strided_slice %3 {offsets = [22, 0], sizes = [1, 32], strides = [1, 1]} : vector<30x128xf32> to vector<1x32xf32>
    %12 = vector.extract_strided_slice %3 {offsets = [23, 0], sizes = [1, 32], strides = [1, 1]} : vector<30x128xf32> to vector<1x32xf32>
    %13 = vector.extract_strided_slice %3 {offsets = [24, 0], sizes = [1, 32], strides = [1, 1]} : vector<30x128xf32> to vector<1x32xf32>
    %14 = vector.extract_strided_slice %3 {offsets = [25, 0], sizes = [1, 32], strides = [1, 1]} : vector<30x128xf32> to vector<1x32xf32>
    %15 = vector.extract_strided_slice %3 {offsets = [26, 0], sizes = [1, 32], strides = [1, 1]} : vector<30x128xf32> to vector<1x32xf32>
    %16 = vector.extract_strided_slice %3 {offsets = [27, 0], sizes = [1, 96], strides = [1, 1]} : vector<30x128xf32> to vector<1x96xf32>
    %17 = vector.extract_strided_slice %3 {offsets = [28, 0], sizes = [1, 64], strides = [1, 1]} : vector<30x128xf32> to vector<1x64xf32>
    %18 = vector.extract_strided_slice %3 {offsets = [29, 0], sizes = [1, 128], strides = [1, 1]} : vector<30x128xf32> to vector<1x128xf32>
    %c0_3 = arith.constant 0 : index
    %c0_4 = arith.constant 0 : index
    %19 = vector.load %arg3[%c0_3, %c0_4] : memref<64x64xf32, #tpu.memory_space<vmem>>, vector<64x64xf32>
    %20 = vector.extract_strided_slice %19 {offsets = [0, 0], sizes = [64, 32], strides = [1, 1]} : vector<64x64xf32> to vector<64x32xf32>
    %21 = vector.extract_strided_slice %19 {offsets = [0, 32], sizes = [64, 32], strides = [1, 1]} : vector<64x64xf32> to vector<64x32xf32>
    %c0_5 = arith.constant 0 : index
    %c0_6 = arith.constant 0 : index
    %22 = vector.load %arg4[%c0_5, %c0_6] : memref<32x352xf32, #tpu.memory_space<vmem>>, vector<32x352xf32>
    %23 = vector.extract_strided_slice %22 {offsets = [0, 0], sizes = [32, 96], strides = [1, 1]} : vector<32x352xf32> to vector<32x96xf32>
    %24 = vector.extract_strided_slice %22 {offsets = [0, 96], sizes = [32, 32], strides = [1, 1]} : vector<32x352xf32> to vector<32x32xf32>
    %25 = vector.extract_strided_slice %22 {offsets = [0, 128], sizes = [32, 128], strides = [1, 1]} : vector<32x352xf32> to vector<32x128xf32>
    %26 = vector.extract_strided_slice %22 {offsets = [0, 256], sizes = [32, 32], strides = [1, 1]} : vector<32x352xf32> to vector<32x32xf32>
    %27 = vector.extract_strided_slice %22 {offsets = [0, 288], sizes = [32, 64], strides = [1, 1]} : vector<32x352xf32> to vector<32x64xf32>
    %28 = tpu.iota {dimensions = array<i32: 0>} : vector<16x16xi32>
    %29 = tpu.iota {dimensions = array<i32: 1>} : vector<16x16xi32>
    %false = arith.constant false
    %30 = vector.broadcast %false : i1 to vector<16x16xi1>
    %c0_7 = arith.constant 0 : index
    %31 = memref.load %arg1[%c0_7] : memref<2xi32, #tpu.memory_space<smem>>
    %c0_i32 = arith.constant 0 : i32
    %32 = vector.broadcast %c0_i32 : i32 to vector<16x16xi32>
    %33 = arith.cmpi sge, %28, %32 : vector<16x16xi32>
    %c8_i32 = arith.constant 8 : i32
    %34 = vector.broadcast %c8_i32 : i32 to vector<16x16xi32>
    %35 = arith.cmpi slt, %28, %34 : vector<16x16xi32>
    %36 = arith.andi %33, %35 : vector<16x16xi1>
    %c0_i32_8 = arith.constant 0 : i32
    %37 = vector.broadcast %c0_i32_8 : i32 to vector<16x16xi32>
    %38 = arith.cmpi sge, %29, %37 : vector<16x16xi32>
    %39 = arith.andi %36, %38 : vector<16x16xi1>
    %c0_i32_9 = arith.constant 0 : i32
    %40 = arith.addi %c0_i32_9, %31 : i32
    %41 = vector.broadcast %40 : i32 to vector<16x16xi32>
    %42 = arith.cmpi slt, %29, %41 : vector<16x16xi32>
    %43 = arith.andi %39, %42 : vector<16x16xi1>
    %44 = arith.ori %30, %43 : vector<16x16xi1>
    %c1 = arith.constant 1 : index
    %45 = memref.load %arg1[%c1] : memref<2xi32, #tpu.memory_space<smem>>
    %c8_i32_10 = arith.constant 8 : i32
    %46 = vector.broadcast %c8_i32_10 : i32 to vector<16x16xi32>
    %47 = arith.cmpi sge, %28, %46 : vector<16x16xi32>
    %c16_i32 = arith.constant 16 : i32
    %48 = vector.broadcast %c16_i32 : i32 to vector<16x16xi32>
    %49 = arith.cmpi slt, %28, %48 : vector<16x16xi32>
    %50 = arith.andi %47, %49 : vector<16x16xi1>
    %c8_i32_11 = arith.constant 8 : i32
    %51 = vector.broadcast %c8_i32_11 : i32 to vector<16x16xi32>
    %52 = arith.cmpi sge, %29, %51 : vector<16x16xi32>
    %53 = arith.andi %50, %52 : vector<16x16xi1>
    %c8_i32_12 = arith.constant 8 : i32
    %54 = arith.addi %c8_i32_12, %45 : i32
    %55 = vector.broadcast %54 : i32 to vector<16x16xi32>
    %56 = arith.cmpi slt, %29, %55 : vector<16x16xi32>
    %57 = arith.andi %53, %56 : vector<16x16xi1>
    %58 = arith.ori %44, %57 : vector<16x16xi1>
    %cst = arith.constant 0.000000e+00 : f32
    %cst_13 = arith.constant -1.000000e+09 : f32
    %59 = vector.broadcast %cst : f32 to vector<16x16xf32>
    %60 = vector.broadcast %cst_13 : f32 to vector<16x16xf32>
    %61 = arith.select %58, %59, %60 : vector<16x16xi1>, vector<16x16xf32>
    %62 = tpu.iota {dimensions = array<i32: 1>} : vector<16x64xi32>
    %63 = vector.broadcast %1 : vector<16x1xi32> to vector<16x64xi32>
    %64 = arith.cmpi eq, %63, %62 : vector<16x64xi32>
    %65 = arith.extui %64 : vector<16x64xi1> to vector<16x64xi32>
    %66 = arith.sitofp %65 : vector<16x64xi32> to vector<16x64xf32>
    %cst_14 = arith.constant dense<0.000000e+00> : vector<16x32xf32>
    %67 = tpu.matmul %66, %20, %cst_14 {dimension_numbers = #tpu.dot_dimension_numbers<[1], [0], [0], [1], [0, 0, 1, 1], [], []>} : vector<16x64xf32>, vector<64x32xf32>, vector<16x32xf32> -> vector<16x32xf32>
    %c0_i32_15 = arith.constant 0 : i32
    %68 = vector.broadcast %c0_i32_15 : i32 to vector<16x1xi32>
    %69 = arith.cmpi eq, %2, %68 : vector<16x1xi32>
    %70 = vector.shape_cast %69 : vector<16x1xi1> to vector<16x1xi1>
    %71 = vector.broadcast %70 : vector<16x1xi1> to vector<16x32xi1>
    %72 = vector.shape_cast %5 : vector<1x32xf32> to vector<1x32xf32>
    %73 = vector.broadcast %72 : vector<1x32xf32> to vector<16x32xf32>
    %74 = vector.shape_cast %6 : vector<1x32xf32> to vector<1x32xf32>
    %75 = vector.broadcast %74 : vector<1x32xf32> to vector<16x32xf32>
    %76 = arith.select %71, %73, %75 : vector<16x32xi1>, vector<16x32xf32>
    %77 = arith.addf %67, %76 : vector<16x32xf32>
    %78 = arith.addf %77, %4 : vector<16x32xf32>
    %cst_16 = arith.constant dense<0.000000e+00> : vector<16xf32>
    %79 = vector.multi_reduction <add>, %78, %cst_16 [1] : vector<16x32xf32> to vector<16xf32>
    %80 = vector.shape_cast %79 : vector<16xf32> to vector<16x1xf32>
    %cst_17 = arith.constant 3.200000e+01 : f32
    %81 = vector.broadcast %cst_17 : f32 to vector<16x1xf32>
    %82 = arith.divf %80, %81 : vector<16x1xf32>
    %83 = vector.broadcast %82 : vector<16x1xf32> to vector<16x32xf32>
    %84 = arith.subf %78, %83 : vector<16x32xf32>
    %85 = arith.mulf %84, %84 : vector<16x32xf32>
    %cst_18 = arith.constant dense<0.000000e+00> : vector<16xf32>
    %86 = vector.multi_reduction <add>, %85, %cst_18 [1] : vector<16x32xf32> to vector<16xf32>
    %87 = vector.shape_cast %86 : vector<16xf32> to vector<16x1xf32>
    %cst_19 = arith.constant 3.200000e+01 : f32
    %88 = vector.broadcast %cst_19 : f32 to vector<16x1xf32>
    %89 = arith.divf %87, %88 : vector<16x1xf32>
    %90 = vector.broadcast %82 : vector<16x1xf32> to vector<16x32xf32>
    %91 = arith.subf %78, %90 : vector<16x32xf32>
    %cst_20 = arith.constant 9.99999996E-13 : f32
    %92 = vector.broadcast %cst_20 : f32 to vector<16x1xf32>
    %93 = arith.addf %89, %92 : vector<16x1xf32>
    %94 = math.rsqrt %93 : vector<16x1xf32>
    %95 = vector.broadcast %94 : vector<16x1xf32> to vector<16x32xf32>
    %96 = arith.mulf %91, %95 : vector<16x32xf32>
    %97 = vector.broadcast %7 : vector<1x32xf32> to vector<16x32xf32>
    %98 = arith.mulf %96, %97 : vector<16x32xf32>
    %99 = vector.broadcast %8 : vector<1x32xf32> to vector<16x32xf32>
    %100 = arith.addf %98, %99 : vector<16x32xf32>
    %cst_21 = arith.constant dense<0.000000e+00> : vector<16x96xf32>
    %101 = tpu.matmul %100, %23, %cst_21 {dimension_numbers = #tpu.dot_dimension_numbers<[1], [0], [0], [1], [0, 0, 1, 1], [], []>} : vector<16x32xf32>, vector<32x96xf32>, vector<16x96xf32> -> vector<16x96xf32>
    %102 = vector.broadcast %16 : vector<1x96xf32> to vector<16x96xf32>
    %103 = arith.addf %101, %102 : vector<16x96xf32>
    %104 = vector.extract_strided_slice %103 {offsets = [0, 0], sizes = [16, 16], strides = [1, 1]} : vector<16x96xf32> to vector<16x16xf32>
    %105 = vector.extract_strided_slice %103 {offsets = [0, 32], sizes = [16, 16], strides = [1, 1]} : vector<16x96xf32> to vector<16x16xf32>
    %106 = vector.extract_strided_slice %103 {offsets = [0, 64], sizes = [16, 16], strides = [1, 1]} : vector<16x96xf32> to vector<16x16xf32>
    %cst_22 = arith.constant dense<0.000000e+00> : vector<16x16xf32>
    %107 = tpu.matmul %104, %105, %cst_22 {dimension_numbers = #tpu.dot_dimension_numbers<[1], [1], [0], [0], [0, 0, 1, 0], [], []>} : vector<16x16xf32>, vector<16x16xf32>, vector<16x16xf32> -> vector<16x16xf32>
    %cst_23 = arith.constant 2.500000e-01 : f32
    %108 = vector.broadcast %cst_23 : f32 to vector<16x16xf32>
    %109 = arith.mulf %107, %108 : vector<16x16xf32>
    %110 = arith.addf %109, %61 : vector<16x16xf32>
    %cst_24 = arith.constant dense<0xFF800000> : vector<16xf32>
    %111 = vector.multi_reduction <maximumf>, %110, %cst_24 [1] : vector<16x16xf32> to vector<16xf32>
    %112 = vector.shape_cast %111 : vector<16xf32> to vector<16x1xf32>
    %113 = vector.broadcast %112 : vector<16x1xf32> to vector<16x16xf32>
    %114 = arith.subf %110, %113 : vector<16x16xf32>
    %115 = math.exp %114 : vector<16x16xf32>
    %cst_25 = arith.constant dense<0.000000e+00> : vector<16xf32>
    %116 = vector.multi_reduction <add>, %115, %cst_25 [1] : vector<16x16xf32> to vector<16xf32>
    %117 = vector.shape_cast %116 : vector<16xf32> to vector<16x1xf32>
    %118 = tpu.reciprocal %117 : vector<16x1xf32> -> vector<16x1xf32>
    %119 = vector.broadcast %118 : vector<16x1xf32> to vector<16x16xf32>
    %120 = arith.mulf %115, %119 : vector<16x16xf32>
    %cst_26 = arith.constant dense<0.000000e+00> : vector<16x16xf32>
    %121 = tpu.matmul %120, %106, %cst_26 {dimension_numbers = #tpu.dot_dimension_numbers<[1], [0], [0], [1], [0, 0, 1, 1], [], []>} : vector<16x16xf32>, vector<16x16xf32>, vector<16x16xf32> -> vector<16x16xf32>
    %122 = vector.extract_strided_slice %103 {offsets = [0, 16], sizes = [16, 16], strides = [1, 1]} : vector<16x96xf32> to vector<16x16xf32>
    %123 = vector.extract_strided_slice %103 {offsets = [0, 48], sizes = [16, 16], strides = [1, 1]} : vector<16x96xf32> to vector<16x16xf32>
    %124 = vector.extract_strided_slice %103 {offsets = [0, 80], sizes = [16, 16], strides = [1, 1]} : vector<16x96xf32> to vector<16x16xf32>
    %cst_27 = arith.constant dense<0.000000e+00> : vector<16x16xf32>
    %125 = tpu.matmul %122, %123, %cst_27 {dimension_numbers = #tpu.dot_dimension_numbers<[1], [1], [0], [0], [0, 0, 1, 0], [], []>} : vector<16x16xf32>, vector<16x16xf32>, vector<16x16xf32> -> vector<16x16xf32>
    %cst_28 = arith.constant 2.500000e-01 : f32
    %126 = vector.broadcast %cst_28 : f32 to vector<16x16xf32>
    %127 = arith.mulf %125, %126 : vector<16x16xf32>
    %128 = arith.addf %127, %61 : vector<16x16xf32>
    %cst_29 = arith.constant dense<0xFF800000> : vector<16xf32>
    %129 = vector.multi_reduction <maximumf>, %128, %cst_29 [1] : vector<16x16xf32> to vector<16xf32>
    %130 = vector.shape_cast %129 : vector<16xf32> to vector<16x1xf32>
    %131 = vector.broadcast %130 : vector<16x1xf32> to vector<16x16xf32>
    %132 = arith.subf %128, %131 : vector<16x16xf32>
    %133 = math.exp %132 : vector<16x16xf32>
    %cst_30 = arith.constant dense<0.000000e+00> : vector<16xf32>
    %134 = vector.multi_reduction <add>, %133, %cst_30 [1] : vector<16x16xf32> to vector<16xf32>
    %135 = vector.shape_cast %134 : vector<16xf32> to vector<16x1xf32>
    %136 = tpu.reciprocal %135 : vector<16x1xf32> -> vector<16x1xf32>
    %137 = vector.broadcast %136 : vector<16x1xf32> to vector<16x16xf32>
    %138 = arith.mulf %133, %137 : vector<16x16xf32>
    %cst_31 = arith.constant dense<0.000000e+00> : vector<16x16xf32>
    %139 = tpu.matmul %138, %124, %cst_31 {dimension_numbers = #tpu.dot_dimension_numbers<[1], [0], [0], [1], [0, 0, 1, 1], [], []>} : vector<16x16xf32>, vector<16x16xf32>, vector<16x16xf32> -> vector<16x16xf32>
    %140 = tpu.concatenate %121, %139 in 1 : vector<16x16xf32>, vector<16x16xf32> -> vector<16x32xf32>
    %cst_32 = arith.constant dense<0.000000e+00> : vector<16x32xf32>
    %141 = tpu.matmul %140, %24, %cst_32 {dimension_numbers = #tpu.dot_dimension_numbers<[1], [0], [0], [1], [0, 0, 1, 1], [], []>} : vector<16x32xf32>, vector<32x32xf32>, vector<16x32xf32> -> vector<16x32xf32>
    %142 = vector.broadcast %9 : vector<1x32xf32> to vector<16x32xf32>
    %143 = arith.addf %141, %142 : vector<16x32xf32>
    %144 = arith.addf %100, %143 : vector<16x32xf32>
    %cst_33 = arith.constant dense<0.000000e+00> : vector<16xf32>
    %145 = vector.multi_reduction <add>, %144, %cst_33 [1] : vector<16x32xf32> to vector<16xf32>
    %146 = vector.shape_cast %145 : vector<16xf32> to vector<16x1xf32>
    %cst_34 = arith.constant 3.200000e+01 : f32
    %147 = vector.broadcast %cst_34 : f32 to vector<16x1xf32>
    %148 = arith.divf %146, %147 : vector<16x1xf32>
    %149 = vector.broadcast %148 : vector<16x1xf32> to vector<16x32xf32>
    %150 = arith.subf %144, %149 : vector<16x32xf32>
    %151 = arith.mulf %150, %150 : vector<16x32xf32>
    %cst_35 = arith.constant dense<0.000000e+00> : vector<16xf32>
    %152 = vector.multi_reduction <add>, %151, %cst_35 [1] : vector<16x32xf32> to vector<16xf32>
    %153 = vector.shape_cast %152 : vector<16xf32> to vector<16x1xf32>
    %cst_36 = arith.constant 3.200000e+01 : f32
    %154 = vector.broadcast %cst_36 : f32 to vector<16x1xf32>
    %155 = arith.divf %153, %154 : vector<16x1xf32>
    %156 = vector.broadcast %148 : vector<16x1xf32> to vector<16x32xf32>
    %157 = arith.subf %144, %156 : vector<16x32xf32>
    %cst_37 = arith.constant 9.99999996E-13 : f32
    %158 = vector.broadcast %cst_37 : f32 to vector<16x1xf32>
    %159 = arith.addf %155, %158 : vector<16x1xf32>
    %160 = math.rsqrt %159 : vector<16x1xf32>
    %161 = vector.broadcast %160 : vector<16x1xf32> to vector<16x32xf32>
    %162 = arith.mulf %157, %161 : vector<16x32xf32>
    %163 = vector.broadcast %10 : vector<1x32xf32> to vector<16x32xf32>
    %164 = arith.mulf %162, %163 : vector<16x32xf32>
    %165 = vector.broadcast %11 : vector<1x32xf32> to vector<16x32xf32>
    %166 = arith.addf %164, %165 : vector<16x32xf32>
    %167 = vector.extract_strided_slice %166 {offsets = [0, 0], sizes = [1, 32], strides = [1, 1]} : vector<16x32xf32> to vector<1x32xf32>
    %168 = vector.extract_strided_slice %166 {offsets = [8, 0], sizes = [1, 32], strides = [1, 1]} : vector<16x32xf32> to vector<1x32xf32>
    %169 = tpu.concatenate %167, %168 in 0 : vector<1x32xf32>, vector<1x32xf32> -> vector<2x32xf32>
    %cst_38 = arith.constant dense<0.000000e+00> : vector<2x64xf32>
    %170 = tpu.matmul %169, %27, %cst_38 {dimension_numbers = #tpu.dot_dimension_numbers<[1], [0], [0], [1], [0, 0, 1, 1], [], []>} : vector<2x32xf32>, vector<32x64xf32>, vector<2x64xf32> -> vector<2x64xf32>
    %171 = vector.broadcast %17 : vector<1x64xf32> to vector<2x64xf32>
    %172 = arith.addf %170, %171 : vector<2x64xf32>
    %cst_39 = arith.constant 5.000000e-01 : f32
    %173 = vector.broadcast %cst_39 : f32 to vector<2x64xf32>
    %174 = arith.mulf %173, %172 : vector<2x64xf32>
    %cst_40 = arith.constant 4.471500e-02 : f32
    %175 = vector.broadcast %cst_40 : f32 to vector<2x64xf32>
    %176 = arith.mulf %175, %172 : vector<2x64xf32>
    %177 = arith.mulf %176, %172 : vector<2x64xf32>
    %178 = arith.mulf %177, %172 : vector<2x64xf32>
    %179 = arith.addf %172, %178 : vector<2x64xf32>
    %cst_41 = arith.constant 0.797884583 : f32
    %180 = vector.broadcast %cst_41 : f32 to vector<2x64xf32>
    %181 = arith.mulf %180, %179 : vector<2x64xf32>
    %182 = math.tanh %181 : vector<2x64xf32>
    %cst_42 = arith.constant 1.000000e+00 : f32
    %183 = vector.broadcast %cst_42 : f32 to vector<2x64xf32>
    %184 = arith.addf %183, %182 : vector<2x64xf32>
    %185 = arith.mulf %174, %184 : vector<2x64xf32>
    %cst_43 = arith.constant dense<0.000000e+00> : vector<2x32xf32>
    %186 = tpu.matmul %185, %21, %cst_43 {dimension_numbers = #tpu.dot_dimension_numbers<[1], [0], [0], [1], [0, 0, 1, 1], [], []>} : vector<2x64xf32>, vector<64x32xf32>, vector<2x32xf32> -> vector<2x32xf32>
    %187 = vector.broadcast %12 : vector<1x32xf32> to vector<2x32xf32>
    %188 = arith.addf %186, %187 : vector<2x32xf32>
    %189 = arith.addf %169, %188 : vector<2x32xf32>
    %cst_44 = arith.constant dense<0.000000e+00> : vector<2xf32>
    %190 = vector.multi_reduction <add>, %189, %cst_44 [1] : vector<2x32xf32> to vector<2xf32>
    %191 = vector.shape_cast %190 : vector<2xf32> to vector<2x1xf32>
    %cst_45 = arith.constant 3.200000e+01 : f32
    %192 = vector.broadcast %cst_45 : f32 to vector<2x1xf32>
    %193 = arith.divf %191, %192 : vector<2x1xf32>
    %194 = vector.broadcast %193 : vector<2x1xf32> to vector<2x32xf32>
    %195 = arith.subf %189, %194 : vector<2x32xf32>
    %196 = arith.mulf %195, %195 : vector<2x32xf32>
    %cst_46 = arith.constant dense<0.000000e+00> : vector<2xf32>
    %197 = vector.multi_reduction <add>, %196, %cst_46 [1] : vector<2x32xf32> to vector<2xf32>
    %198 = vector.shape_cast %197 : vector<2xf32> to vector<2x1xf32>
    %cst_47 = arith.constant 3.200000e+01 : f32
    %199 = vector.broadcast %cst_47 : f32 to vector<2x1xf32>
    %200 = arith.divf %198, %199 : vector<2x1xf32>
    %201 = vector.broadcast %193 : vector<2x1xf32> to vector<2x32xf32>
    %202 = arith.subf %189, %201 : vector<2x32xf32>
    %cst_48 = arith.constant 9.99999996E-13 : f32
    %203 = vector.broadcast %cst_48 : f32 to vector<2x1xf32>
    %204 = arith.addf %200, %203 : vector<2x1xf32>
    %205 = math.rsqrt %204 : vector<2x1xf32>
    %206 = vector.broadcast %205 : vector<2x1xf32> to vector<2x32xf32>
    %207 = arith.mulf %202, %206 : vector<2x32xf32>
    %208 = vector.broadcast %13 : vector<1x32xf32> to vector<2x32xf32>
    %209 = arith.mulf %207, %208 : vector<2x32xf32>
    %210 = vector.broadcast %14 : vector<1x32xf32> to vector<2x32xf32>
    %211 = arith.addf %209, %210 : vector<2x32xf32>
    %cst_49 = arith.constant dense<0.000000e+00> : vector<2x32xf32>
    %212 = tpu.matmul %211, %26, %cst_49 {dimension_numbers = #tpu.dot_dimension_numbers<[1], [0], [0], [1], [0, 0, 1, 1], [], []>} : vector<2x32xf32>, vector<32x32xf32>, vector<2x32xf32> -> vector<2x32xf32>
    %213 = vector.broadcast %15 : vector<1x32xf32> to vector<2x32xf32>
    %214 = arith.addf %212, %213 : vector<2x32xf32>
    %215 = math.tanh %214 : vector<2x32xf32>
    %cst_50 = arith.constant dense<0.000000e+00> : vector<2x128xf32>
    %216 = tpu.matmul %215, %25, %cst_50 {dimension_numbers = #tpu.dot_dimension_numbers<[1], [0], [0], [1], [0, 0, 1, 1], [], []>} : vector<2x32xf32>, vector<32x128xf32>, vector<2x128xf32> -> vector<2x128xf32>
    %217 = vector.broadcast %18 : vector<1x128xf32> to vector<2x128xf32>
    %218 = arith.addf %216, %217 : vector<2x128xf32>
    %c0_51 = arith.constant 0 : index
    %c0_52 = arith.constant 0 : index
    %219 = vector.load %arg6[%c0_51, %c0_52] : memref<2x128xf32, #tpu.memory_space<vmem>>, vector<2x128xf32>
    tpu.vector_store %arg6[%c0_51, %c0_52], %218 {strides = array<i32>} : memref<2x128xf32, #tpu.memory_space<vmem>>, vector<2x128xf32>,
    return
  }
  func.func @transform_0(%arg0: i32, %arg1: memref<2xi32, #tpu.memory_space<smem>>) -> (i32, i32) {
    %c0_i32 = arith.constant 0 : i32
    %c0_i32_0 = arith.constant 0 : i32
    %c0_i32_1 = arith.constant 0 : i32
    return %c0_i32, %c0_i32_0 : i32, i32
  }
  func.func @transform_1(%arg0: i32, %arg1: memref<2xi32, #tpu.memory_space<smem>>) -> (i32, i32) {
    %c0_i32 = arith.constant 0 : i32
    %c0_i32_0 = arith.constant 0 : i32
    %c0_i32_1 = arith.constant 0 : i32
    return %c0_i32, %c0_i32_0 : i32, i32
  }
  func.func @transform_2(%arg0: i32, %arg1: memref<2xi32, #tpu.memory_space<smem>>) -> (i32, i32) {
    %c0_i32 = arith.constant 0 : i32
    %c0_i32_0 = arith.constant 0 : i32
    %c0_i32_1 = arith.constant 0 : i32
    return %c0_i32, %c0_i32_0 : i32, i32
  }
  func.func @transform_3(%arg0: i32, %arg1: memref<2xi32, #tpu.memory_space<smem>>) -> (i32, i32) {
    %c0_i32 = arith.constant 0 : i32
    %c0_i32_0 = arith.constant 0 : i32
    %c0_i32_1 = arith.constant 0 : i32
    return %c0_i32, %c0_i32_0 : i32, i32
  }
  func.func @transform_4(%arg0: i32, %arg1: memref<2xi32, #tpu.memory_space<smem>>) -> (i32, i32) {
    %c0_i32 = arith.constant 0 : i32
    %c0_i32_0 = arith.constant 0 : i32
    %c0_i32_1 = arith.constant 0 : i32
    return %c0_i32, %c0_i32_0 : i32, i32
  }
}

</mosaic_0001>

<llo_original>
// kernel: bert_classifier.1
$region0: #{bert_classifier.1}
  #allocation0 [shape = 'u32[]', space=smem, size = 0x4, offset = 0x4, fixed_abs, tag = 'smem constant byte address 0x4 - core index']
  #allocation1 [shape = 'u32[144,128]{1,0:T(1,128)}', space=vmem, size = 0x12000, scoped, tag = 'internal scratch']
  #allocation2 [shape = 's32[1]{0}', space=sflag, size = 0x4, scoped, tag = 'scoped memory for bert_classifier.1']
  #allocation3 [shape = 'u8[512]{0}', space=smem, size = 0x200, scoped, tag = 'prefetched SMEM operand 0']
  %s0 = inlined_call_operand.vmem [shape: s32[2], index: 0, kind: input, shape index: {}]
  %s1 = inlined_call_operand.vmem [shape: s32[16,2], index: 1, kind: input, shape index: {}]
  %s2 = inlined_call_operand.hbm [shape: f32[64,64], index: 2, kind: input, shape index: {}]
  %s3 = inlined_call_operand.hbm [shape: f32[32,352], index: 3, kind: input, shape index: {}]
  %s4 = inlined_call_operand.vmem [shape: f32[30,128], index: 4, kind: input, shape index: {}]
  %s5 = inlined_call_operand.hbm [shape: f32[2,128], index: 5, kind: output, shape index: {}]
  %s6 = sld [smem:[#allocation0]]
  $region34: #{bert_classifier.1} parent=0
    _
  %s8 = ssub.s32 1, %s6
  %s9 = scalar_select 0, %s8, %s6
  %s10 = sshll.u32 %s0, 4
  %s11 = int_to_ptr.vmem [resolvable:$true] %s10
  %13 = dma.vmem_to_smem %s11, 16, [#allocation3], [#allocation2]
  %14 = dma.done [#allocation2], 16
  %15 = sfence
  $region1: #{bert_classifier.1} parent=0
    #allocation4 [shape = 'u8[32768]{0}', space=vmem, size = 0x8000, scoped, tag = 'input window, operand 2, single buffered']
    #allocation5 [shape = 's32[1]{0}', space=sflag, size = 0x4, scoped, tag = 'scoped memory for bert_classifier.1']
    #allocation6 [shape = 's32[1]{0}', space=sflag, size = 0x4, scoped, tag = 'scoped memory for bert_classifier.1']
    #allocation7 [shape = 'u8[49152]{0}', space=vmem, size = 0xc000, scoped, tag = 'input window, operand 3, single buffered']
    #allocation8 [shape = 's32[1]{0}', space=sflag, size = 0x4, scoped, tag = 'scoped memory for bert_classifier.1']
    #allocation9 [shape = 'u8[1024]{0}', space=vmem, size = 0x400, scoped, tag = 'output window, operand 0, single buffered']
    %16 = vsyncpa [#allocation5], 0
    %17 = vsyncpa [#allocation8], 0
    %18 = vsyncpa [#allocation6], 0
    // Predicated region
    $region2: #{bert_classifier.1} parent=1 // pred_check
      _
    $region3: #{bert_classifier.1} parent=1 // pred_check_branch
      %20 = sbr.rel (0) target = $region5
    $region4: #{bert_classifier.1} parent=1 // pred_region
      _
    $region5: #{bert_classifier.1} parent=1 // pred_fallthru
      _
    // Predicated region
    $region6: #{bert_classifier.1} parent=1 // pred_check
      _
    $region7: #{bert_classifier.1} parent=1 // pred_check_branch
      %22 = sbr.rel (0) target = $region9
    $region8: #{bert_classifier.1} parent=1 // pred_region
      %s24 = ssub.s32 1024, 1024
      %25 = vsyncadd [#allocation5], %s24
      %s26 = sshll.u32 [#allocation4], 4
      %s27 = int_to_ptr.vmem [resolvable:$true] %s26
      %32 = dma.hbm_to_vmem [thread:$0]  %s2, 1024, %s27, [#allocation5], 128, 128, 8
    $region9: #{bert_classifier.1} parent=1 // pred_fallthru
      _
    // Predicated region
    $region10: #{bert_classifier.1} parent=1 // pred_check
      _
    $region11: #{bert_classifier.1} parent=1 // pred_check_branch
      %34 = sbr.rel (0) target = $region13
    $region12: #{bert_classifier.1} parent=1 // pred_region
      %s36 = ssub.s32 1536, 1536
      %37 = vsyncadd [#allocation8], %s36
      %s38 = sshll.u32 [#allocation7], 4
      %s39 = int_to_ptr.vmem [resolvable:$true] %s38
      %44 = dma.hbm_to_vmem [thread:$0]  %s3, 1536, %s39, [#allocation8], 384, 384, 24
    $region13: #{bert_classifier.1} parent=1 // pred_fallthru
      _
    // Predicated region
    $region14: #{bert_classifier.1} parent=1 // pred_check
      _
    $region15: #{bert_classifier.1} parent=1 // pred_check_branch
      %46 = sbr.rel (0) target = $region17
    $region16: #{bert_classifier.1} parent=1 // pred_region
      _
    $region17: #{bert_classifier.1} parent=1 // pred_fallthru
      _
    // Predicated region
    $region18: #{bert_classifier.1} parent=1 // pred_check
      _
    $region19: #{bert_classifier.1} parent=1 // pred_check_branch
      %48 = sbr.rel (0) target = $region21
    $region20: #{bert_classifier.1} parent=1 // pred_region
      %49 = dma.done [#allocation5], 1024
    $region21: #{bert_classifier.1} parent=1 // pred_fallthru
      _
    // Predicated region
    $region22: #{bert_classifier.1} parent=1 // pred_check
      _
    $region23: #{bert_classifier.1} parent=1 // pred_check_branch
      %51 = sbr.rel (0) target = $region25
    $region24: #{bert_classifier.1} parent=1 // pred_region
      %52 = dma.done [#allocation8], 1536
    $region25: #{bert_classifier.1} parent=1 // pred_fallthru
      _
    %v53 = vld [vmem:[%s1] sm:$0xff]
    %v54 = vld [vmem:[%s1 + $0x8] sm:$0xff]
    %v55 = vld [vmem:[%s4] sm:$0xff]
    %v56 = vld [vmem:[%s4 + $0x8] sm:$0xff]
    %v57 = vld [vmem:[%s4 + $0x10] sm:$0xff]
    %v58 = vld [vmem:[%s4 + $0x18] sm:$0x3f]
    %v59 = vld [vmem:[#allocation4] sm:$0xff]
    %v60 = vld [vmem:[#allocation4 + $0x8] sm:$0xff]
    %v61 = vld [vmem:[#allocation4 + $0x10] sm:$0xff]
    %v62 = vld [vmem:[#allocation4 + $0x18] sm:$0xff]
    %v63 = vld [vmem:[#allocation4 + $0x20] sm:$0xff]
    %v64 = vld [vmem:[#allocation4 + $0x28] sm:$0xff]
    %v65 = vld [vmem:[#allocation4 + $0x30] sm:$0xff]
    %v66 = vld [vmem:[#allocation4 + $0x38] sm:$0xff]
    %v67 = vld [vmem:[#allocation7] sm:$0xff]
    %v68 = vld [vmem:[#allocation7 + $0x8] sm:$0xff]
    %v69 = vld [vmem:[#allocation7 + $0x10] sm:$0xff]
    %v70 = vld [vmem:[#allocation7 + $0x18] sm:$0xff]
    %v71 = vld [vmem:[#allocation7 + $0x20] sm:$0xff]
    %v72 = vld [vmem:[#allocation7 + $0x28] sm:$0xff]
    %v73 = vld [vmem:[#allocation7 + $0x30] sm:$0xff]
    %v74 = vld [vmem:[#allocation7 + $0x38] sm:$0xff]
    %v75 = vld [vmem:[#allocation7 + $0x40] sm:$0xff]
    %v76 = vld [vmem:[#allocation7 + $0x48] sm:$0xff]
    %v77 = vld [vmem:[#allocation7 + $0x50] sm:$0xff]
    %v78 = vld [vmem:[#allocation7 + $0x58] sm:$0xff]
    %v79 = vlaneseq
    %v80 = vshrl.u32 %v79, 7
    %v81 = vadd.s32 %v80, 8
    %v82 = vlaneseq
    %v83 = vand.u32 %v82, 127
    %s84 = sld [smem:[#allocation3]]
    %vm85 = vcmp.ge.s32.totalorder %v80, 0
    %vm86 = vcmp.ge.s32.totalorder %v81, 0
    %vm87 = vcmp.lt.s32.totalorder %v80, 8
    %vm88 = vcmp.lt.s32.totalorder %v81, 8
    %vm89 = vmand %vm85, %vm87
    %vm90 = vmand %vm86, %vm88
    %vm91 = vcmp.ge.s32.totalorder %v83, 0
    %vm92 = vmand %vm89, %vm91
    %vm93 = vmand %vm90, %vm91
    %v94 = vstv %s84
    %vm95 = vcmp.lt.s32.totalorder %v83, %v94
    %vm96 = vmand %vm92, %vm95
    %vm97 = vmand %vm93, %vm95
    %s98 = sld [smem:[#allocation3 + $0x1]]
    %vm99 = vcmp.ge.s32.totalorder %v80, 8
    %vm100 = vcmp.ge.s32.totalorder %v81, 8
    %vm101 = vcmp.lt.s32.totalorder %v80, 16
    %vm102 = vcmp.lt.s32.totalorder %v81, 16
    %vm103 = vmand %vm99, %vm101
    %vm104 = vmand %vm100, %vm102
    %vm105 = vcmp.ge.s32.totalorder %v83, 8
    %vm106 = vmand %vm103, %vm105
    %vm107 = vmand %vm104, %vm105
    %s108 = sadd.s32 %s98, 8
    %v109 = vstv %s108
    %vm110 = vcmp.lt.s32.totalorder %v83, %v109
    %vm111 = vmand %vm106, %vm110
    %vm112 = vmand %vm107, %vm110
    %vm113 = vmor %vm96, %vm111
    %vm114 = vmor %vm97, %vm112
    %v115 = vsel %vm113, 0.0, -1e+09
    %v116 = vsel %vm114, 0.0, -1e+09
    %117 = vset.pattern.permute.xlu0 0
    %118 = vperm.xlu0 %117, %v53
    %v119 = vpop.permute.xlu0 %118
    %120 = vset.pattern.permute.xlu0 0
    %121 = vperm.xlu0 %120, %v54
    %v122 = vpop.permute.xlu0 %121
    %vm123 = vcmp.eq.s32.totalorder %v119, %v83
    %vm124 = vcmp.eq.s32.totalorder %v122, %v83
    %v125 = vsel %vm123, 1, 0
    %v126 = vsel %vm124, 1, 0
    %v127 = vcvt.s32.f32 %v125
    %v128 = vcvt.s32.f32 %v126
    %vm129 = vcmp.eq.s32.totalorder %v53, 0
    %vm130 = vcmp.eq.s32.totalorder %v54, 0
    %v131 = vsel %vm129, 1, 0
    %v132 = vsel %vm130, 1, 0
    %133 = vset.pattern.permute.xlu0 1
    %134 = vperm.xlu0 %133, %v131
    %v135 = vpop.permute.xlu0 %134
    %136 = vset.pattern.permute.xlu0 1
    %137 = vperm.xlu0 %136, %v132
    %v138 = vpop.permute.xlu0 %137
    %vm139 = vcmp.eq.s32.totalorder %v135, 1
    %vm140 = vcmp.eq.s32.totalorder %v138, 1
    %v141 = vlaneseq
    %v142 = vshrl.u32 %v141, 7
    %v143 = vsub.s32 0, %v142
    %v144 = vrot.slane %v57, %v143
    %v145 = vlaneseq
    %v146 = vshrl.u32 %v145, 7
    %v147 = vsub.s32 1, %v146
    %v148 = vrot.slane %v57, %v147
    %v149 = vsel %vm139, %v144, %v148
    %v150 = vsel %vm140, %v144, %v148
    %vm151 = vcmask 523264
    %v153 = vsel %vm151, %v127, 0
    %v156 = vsel %vm151, %v128, 0
    %158 = vmatprep.subr.mxu0 0.0
    %159 = vmatpush1.msra.mxu0 %v59
    %160 = vmatprep.subr.mxu0 0.0
    %161 = vmatpush1.msra.mxu0 %v60
    %162 = vmatprep.subr.mxu0 0.0
    %163 = vmatpush1.msra.mxu0 %v61
    %164 = vmatprep.subr.mxu0 0.0
    %165 = vmatpush1.msra.mxu0 %v62
    %166 = vmatprep.subr.mxu0 0.0
    %167 = vmatpush1.msra.mxu0 %v63
    %168 = vmatprep.subr.mxu0 0.0
    %169 = vmatpush1.msra.mxu0 %v64
    %170 = vmatprep.subr.mxu0 0.0
    %171 = vmatpush1.msra.mxu0 %v65
    %172 = vmatprep.subr.mxu0 0.0
    %173 = vmatpush1.msra.mxu0 %v66
    %174 = vmatprep.subr.mxu0 0.0
    %175 = vmatpush1.msra.mxu0 0.0
    %176 = vmatprep.subr.mxu0 0.0
    %177 = vmatpush1.msra.mxu0 0.0
    %178 = vmatprep.subr.mxu0 0.0
    %179 = vmatpush1.msra.mxu0 0.0
    %180 = vmatprep.subr.mxu0 0.0
    %181 = vmatpush1.msra.mxu0 0.0
    %182 = vmatprep.subr.mxu0 0.0
    %183 = vmatpush1.msra.mxu0 0.0
    %184 = vmatprep.subr.mxu0 0.0
    %185 = vmatpush1.msra.mxu0 0.0
    %186 = vmatprep.subr.mxu0 0.0
    %187 = vmatpush1.msra.mxu0 0.0
    %188 = vmatprep.subr.mxu0 0.0
    %189 = vmatpush1.msra.mxu0 0.0
    %190 = vmatprep.subr.mxu0 0.0
    %191 = vmatpush1.msra.mxu0 0.0
    %192 = vmatprep.subr.mxu0 0.0
    %193 = vmatpush1.msra.mxu0 0.0
    %194 = vmatprep.subr.mxu0 0.0
    %195 = vmatpush1.msra.mxu0 0.0
    %196 = vmatprep.subr.mxu0 0.0
    %197 = vmatpush1.msra.mxu0 0.0
    %198 = vmatprep.subr.mxu0 0.0
    %199 = vmatpush1.msra.mxu0 0.0
    %200 = vmatprep.subr.mxu0 0.0
    %201 = vmatpush1.msra.mxu0 0.0
    %202 = vmatprep.subr.mxu0 0.0
    %203 = vmatpush1.msra.mxu0 0.0
    %204 = vmatprep.subr.mxu0 0.0
    %205 = vmatpush1.msra.mxu0 0.0
    %206 = vmatprep.subr.mxu0 0.0
    %207 = vmatpush1.msra.mxu0 0.0
    %208 = vmatprep.subr.mxu0 0.0
    %209 = vmatpush1.msra.mxu0 0.0
    %210 = vmatprep.subr.mxu0 0.0
    %211 = vmatpush1.msra.mxu0 0.0
    %212 = vmatprep.subr.mxu0 0.0
    %213 = vmatpush1.msra.mxu0 0.0
    %214 = vmatprep.subr.mxu0 0.0
    %215 = vmatpush1.msra.mxu0 0.0
    %216 = vmatprep.subr.mxu0 0.0
    %217 = vmatpush1.msra.mxu0 0.0
    %218 = vmatprep.subr.mxu0 0.0
    %219 = vmatpush1.msra.mxu0 0.0
    %220 = vmatprep.subr.mxu0 0.0
    %221 = vmatpush1.msra.mxu0 0.0
    %222 = vmatprep.mubr.f32.mxu0 0.0
    %223 = vmatmul.mubr.f32.gmra.mrb[0].mxu0 %v153
    %v224 = vpop.f32.mrb[0].mxu0
    %v225 = vadd.f32 %v149, %v224
    %v226 = vpop.f32.mrb[0].mxu0
    %227 = vmatprep.mubr.f32.mxu0 0.0
    %228 = vmatmul.mubr.f32.gmra.mrb[0].mxu0 %v156
    %v229 = vpop.f32.mrb[0].mxu0
    %v230 = vadd.f32 %v150, %v229
    %v231 = vpop.f32.mrb[0].mxu0
    %232 = vdwg.mxu0
    %v233 = vadd.f32 %v225, %v55
    %v234 = vadd.f32 %v230, %v56
    %vm235 = vcmask 261120
    %v236 = vsel %vm235, %v233, 0.0
    %237 = vadd.xlane.f32.xlu0 %v236
    %v238 = vpop.xlane.xlu0 %237
    %v239 = vsel %vm235, %v234, 0.0
    %240 = vadd.xlane.f32.xlu0 %v239
    %v241 = vpop.xlane.xlu0 %240
    %v242 = vrcp.pop 32.0
    %v243 = vmul.f32 %v238, %v242
    %v244 = vmul.f32 %v241, %v242
    %v245 = vsub.f32 %v233, %v243
    %v246 = vsub.f32 %v234, %v244
    %v247 = vmul.f32 %v245, %v245
    %v248 = vmul.f32 %v246, %v246
    %v249 = vsel %vm235, %v247, 0.0
    %250 = vadd.xlane.f32.xlu0 %v249
    %v251 = vpop.xlane.xlu0 %250
    %v252 = vsel %vm235, %v248, 0.0
    %253 = vadd.xlane.f32.xlu0 %v252
    %v254 = vpop.xlane.xlu0 %253
    %v255 = vmul.f32 %v251, %v242
    %v256 = vmul.f32 %v254, %v242
    %v257 = vadd.f32 %v255, 1e-12
    %v258 = vadd.f32 %v256, 1e-12
    %v259 = vrsqrt.pop %v257
    %v260 = vrsqrt.pop %v258
    %v261 = vmul.f32 %v245, %v259
    %v262 = vmul.f32 %v246, %v260
    %v263 = vlaneseq
    %v264 = vshrl.u32 %v263, 7
    %v265 = vsub.s32 2, %v264
    %v266 = vrot.slane %v57, %v265
    %v267 = vmul.f32 %v261, %v266
    %v268 = vmul.f32 %v262, %v266
    %v269 = vlaneseq
    %v270 = vshrl.u32 %v269, 7
    %v271 = vsub.s32 3, %v270
    %v272 = vrot.slane %v57, %v271
    %v273 = vadd.f32 %v267, %v272
    %v274 = vadd.f32 %v268, %v272
    %v275 = vlaneseq
    %v276 = vshrl.u32 %v275, 7
    %v277 = vsub.s32 3, %v276
    %v278 = vrot.slane %v58, %v277
    %v280 = vsel %vm235, %v273, 0
    %v283 = vsel %vm235, %v274, 0
    %285 = vmatprep.subr.mxu0 0.0
    %286 = vmatpush1.msra.mxu0 %v67
    %287 = vmatprep.subr.mxu0 0.0
    %288 = vmatpush1.msra.mxu0 %v70
    %289 = vmatprep.subr.mxu0 0.0
    %290 = vmatpush1.msra.mxu0 %v73
    %291 = vmatprep.subr.mxu0 0.0
    %292 = vmatpush1.msra.mxu0 %v76
    %293 = vmatprep.subr.mxu0 0.0
    %294 = vmatpush1.msra.mxu0 0.0
    %295 = vmatprep.subr.mxu0 0.0
    %296 = vmatpush1.msra.mxu0 0.0
    %297 = vmatprep.subr.mxu0 0.0
    %298 = vmatpush1.msra.mxu0 0.0
    %299 = vmatprep.subr.mxu0 0.0
    %300 = vmatpush1.msra.mxu0 0.0
    %301 = vmatprep.subr.mxu0 0.0
    %302 = vmatpush1.msra.mxu0 0.0
    %303 = vmatprep.subr.mxu0 0.0
    %304 = vmatpush1.msra.mxu0 0.0
    %305 = vmatprep.subr.mxu0 0.0
    %306 = vmatpush1.msra.mxu0 0.0
    %307 = vmatprep.subr.mxu0 0.0
    %308 = vmatpush1.msra.mxu0 0.0
    %309 = vmatprep.subr.mxu0 0.0
    %310 = vmatpush1.msra.mxu0 0.0
    %311 = vmatprep.subr.mxu0 0.0
    %312 = vmatpush1.msra.mxu0 0.0
    %313 = vmatprep.subr.mxu0 0.0
    %314 = vmatpush1.msra.mxu0 0.0
    %315 = vmatprep.subr.mxu0 0.0
    %316 = vmatpush1.msra.mxu0 0.0
    %317 = vmatprep.subr.mxu0 0.0
    %318 = vmatpush1.msra.mxu0 0.0
    %319 = vmatprep.subr.mxu0 0.0
    %320 = vmatpush1.msra.mxu0 0.0
    %321 = vmatprep.subr.mxu0 0.0
    %322 = vmatpush1.msra.mxu0 0.0
    %323 = vmatprep.subr.mxu0 0.0
    %324 = vmatpush1.msra.mxu0 0.0
    %325 = vmatprep.subr.mxu0 0.0
    %326 = vmatpush1.msra.mxu0 0.0
    %327 = vmatprep.subr.mxu0 0.0
    %328 = vmatpush1.msra.mxu0 0.0
    %329 = vmatprep.subr.mxu0 0.0
    %330 = vmatpush1.msra.mxu0 0.0
    %331 = vmatprep.subr.mxu0 0.0
    %332 = vmatpush1.msra.mxu0 0.0
    %333 = vmatprep.subr.mxu0 0.0
    %334 = vmatpush1.msra.mxu0 0.0
    %335 = vmatprep.subr.mxu0 0.0
    %336 = vmatpush1.msra.mxu0 0.0
    %337 = vmatprep.subr.mxu0 0.0
    %338 = vmatpush1.msra.mxu0 0.0
    %339 = vmatprep.subr.mxu0 0.0
    %340 = vmatpush1.msra.mxu0 0.0
    %341 = vmatprep.subr.mxu0 0.0
    %342 = vmatpush1.msra.mxu0 0.0
    %343 = vmatprep.subr.mxu0 0.0
    %344 = vmatpush1.msra.mxu0 0.0
    %345 = vmatprep.subr.mxu0 0.0
    %346 = vmatpush1.msra.mxu0 0.0
    %347 = vmatprep.subr.mxu0 0.0
    %348 = vmatpush1.msra.mxu0 0.0
    %349 = vmatprep.mubr.f32.mxu0 0.0
    %350 = vmatmul.mubr.f32.gmra.mrb[0].mxu0 %v280
    %v351 = vpop.f32.mrb[0].mxu0
    %v352 = vadd.f32 %v278, %v351
    %v353 = vpop.f32.mrb[0].mxu0
    %354 = vmatprep.mubr.f32.mxu0 0.0
    %355 = vmatmul.mubr.f32.gmra.mrb[0].mxu0 %v283
    %v356 = vpop.f32.mrb[0].mxu0
    %v357 = vadd.f32 %v278, %v356
    %v358 = vpop.f32.mrb[0].mxu0
    %359 = vdwg.mxu0
    %362 = vrot.lane.b32.xlu0 %v352, 96
    %v363 = vpop.permute.xlu0 %362
    %364 = vrot.lane.b32.xlu0 %v357, 96
    %v365 = vpop.permute.xlu0 %364
    %vm366 = vcmask 130048
    %v367 = vsel %vm366, %v352, 0
    %v369 = vsel %vm366, %v357, 0
    %v371 = vsel %vm366, %v363, 0
    %v373 = vsel %vm366, %v365, 0
    %375 = vmatprep.subr.mxu0 0.0
    %376 = vmatpush1.xpose.msra.mxu0 %v371
    %377 = vmatprep.subr.mxu0 0.0
    %378 = vmatpush1.xpose.msra.mxu0 %v373
    %379 = vmatprep.subr.mxu0 0.0
    %380 = vmatpush1.xpose.msra.mxu0 0.0
    %381 = vmatprep.subr.mxu0 0.0
    %382 = vmatpush1.xpose.msra.mxu0 0.0
    %383 = vmatprep.subr.mxu0 0.0
    %384 = vmatpush1.xpose.msra.mxu0 0.0
    %385 = vmatprep.subr.mxu0 0.0
    %386 = vmatpush1.xpose.msra.mxu0 0.0
    %387 = vmatprep.subr.mxu0 0.0
    %388 = vmatpush1.xpose.msra.mxu0 0.0
    %389 = vmatprep.subr.mxu0 0.0
    %390 = vmatpush1.xpose.msra.mxu0 0.0
    %391 = vmatprep.subr.mxu0 0.0
    %392 = vmatpush1.xpose.msra.mxu0 0.0
    %393 = vmatprep.subr.mxu0 0.0
    %394 = vmatpush1.xpose.msra.mxu0 0.0
    %395 = vmatprep.subr.mxu0 0.0
    %396 = vmatpush1.xpose.msra.mxu0 0.0
    %397 = vmatprep.subr.mxu0 0.0
    %398 = vmatpush1.xpose.msra.mxu0 0.0
    %399 = vmatprep.subr.mxu0 0.0
    %400 = vmatpush1.xpose.msra.mxu0 0.0
    %401 = vmatprep.subr.mxu0 0.0
    %402 = vmatpush1.xpose.msra.mxu0 0.0
    %403 = vmatprep.subr.mxu0 0.0
    %404 = vmatpush1.xpose.msra.mxu0 0.0
    %405 = vmatprep.subr.mxu0 0.0
    %406 = vmatpush1.xpose.msra.mxu0 0.0
    %407 = vmatprep.subr.mxu0 0.0
    %408 = vmatpush1.xpose.msra.mxu0 0.0
    %409 = vmatprep.subr.mxu0 0.0
    %410 = vmatpush1.xpose.msra.mxu0 0.0
    %411 = vmatprep.subr.mxu0 0.0
    %412 = vmatpush1.xpose.msra.mxu0 0.0
    %413 = vmatprep.subr.mxu0 0.0
    %414 = vmatpush1.xpose.msra.mxu0 0.0
    %415 = vmatprep.subr.mxu0 0.0
    %416 = vmatpush1.xpose.msra.mxu0 0.0
    %417 = vmatprep.subr.mxu0 0.0
    %418 = vmatpush1.xpose.msra.mxu0 0.0
    %419 = vmatprep.subr.mxu0 0.0
    %420 = vmatpush1.xpose.msra.mxu0 0.0
    %421 = vmatprep.subr.mxu0 0.0
    %422 = vmatpush1.xpose.msra.mxu0 0.0
    %423 = vmatprep.subr.mxu0 0.0
    %424 = vmatpush1.xpose.msra.mxu0 0.0
    %425 = vmatprep.subr.mxu0 0.0
    %426 = vmatpush1.xpose.msra.mxu0 0.0
    %427 = vmatprep.subr.mxu0 0.0
    %428 = vmatpush1.xpose.msra.mxu0 0.0
    %429 = vmatprep.subr.mxu0 0.0
    %430 = vmatpush1.xpose.msra.mxu0 0.0
    %431 = vmatprep.subr.mxu0 0.0
    %432 = vmatpush1.xpose.msra.mxu0 0.0
    %433 = vmatprep.subr.mxu0 0.0
    %434 = vmatpush1.xpose.msra.mxu0 0.0
    %435 = vmatprep.subr.mxu0 0.0
    %436 = vmatpush1.xpose.msra.mxu0 0.0
    %437 = vmatprep.subr.mxu0 0.0
    %438 = vmatpush1.xpose.msra.mxu0 0.0
    %439 = vmatprep.mubr.f32.mxu0 0.0
    %440 = vmatmul.mubr.f32.gmra.mrb[0].mxu0 %v367
    %v441 = vpop.f32.mrb[0].mxu0
    %v442 = vadd.f32 0.0, %v441
    %v443 = vpop.f32.mrb[0].mxu0
    %444 = vmatprep.mubr.f32.mxu0 0.0
    %445 = vmatmul.mubr.f32.gmra.mrb[0].mxu0 %v369
    %v446 = vpop.f32.mrb[0].mxu0
    %v447 = vadd.f32 0.0, %v446
    %v448 = vpop.f32.mrb[0].mxu0
    %449 = vdwg.mxu0
    %v450 = vmul.f32 %v442, 0.25
    %v451 = vmul.f32 %v447, 0.25
    %v452 = vadd.f32 %v450, %v115
    %v453 = vadd.f32 %v451, %v116
    %v454 = vsel %vm366, %v452, -inf
    %455 = vmax.xlane.f32.xlu0 %v454
    %v456 = vpop.xlane.xlu0 %455
    %v457 = vsel %vm366, %v453, -inf
    %458 = vmax.xlane.f32.xlu0 %v457
    %v459 = vpop.xlane.xlu0 %458
    %v460 = vsub.f32 %v452, %v456
    %v461 = vsub.f32 %v453, %v459
    %v462 = vmul.f32 %v460, 1.442695
    %v463 = vpow.pop %v462
    %v464 = vmul.f32 %v461, 1.442695
    %v465 = vpow.pop %v464
    %v466 = vsel %vm366, %v463, 0.0
    %467 = vadd.xlane.f32.xlu0 %v466
    %v468 = vpop.xlane.xlu0 %467
    %v469 = vsel %vm366, %v465, 0.0
    %470 = vadd.xlane.f32.xlu0 %v469
    %v471 = vpop.xlane.xlu0 %470
    %v472 = vrcp.pop %v468
    %v473 = vrcp.pop %v471
    %v474 = vmul.f32 %v463, %v472
    %v475 = vmul.f32 %v465, %v473
    %476 = vrot.lane.b32.xlu0 %v352, 64
    %v477 = vpop.permute.xlu0 %476
    %478 = vrot.lane.b32.xlu0 %v357, 64
    %v479 = vpop.permute.xlu0 %478
    %v483 = vsel %vm366, %v474, 0
    %v486 = vsel %vm366, %v475, 0
    %488 = vmatprep.subr.mxu0 0.0
    %489 = vmatpush1.msra.mxu0 %v477
    %490 = vmatprep.subr.mxu0 0.0
    %491 = vmatpush1.msra.mxu0 %v479
    %492 = vmatprep.subr.mxu0 0.0
    %493 = vmatpush1.msra.mxu0 0.0
    %494 = vmatprep.subr.mxu0 0.0
    %495 = vmatpush1.msra.mxu0 0.0
    %496 = vmatprep.subr.mxu0 0.0
    %497 = vmatpush1.msra.mxu0 0.0
    %498 = vmatprep.subr.mxu0 0.0
    %499 = vmatpush1.msra.mxu0 0.0
    %500 = vmatprep.subr.mxu0 0.0
    %501 = vmatpush1.msra.mxu0 0.0
    %502 = vmatprep.subr.mxu0 0.0
    %503 = vmatpush1.msra.mxu0 0.0
    %504 = vmatprep.subr.mxu0 0.0
    %505 = vmatpush1.msra.mxu0 0.0
    %506 = vmatprep.subr.mxu0 0.0
    %507 = vmatpush1.msra.mxu0 0.0
    %508 = vmatprep.subr.mxu0 0.0
    %509 = vmatpush1.msra.mxu0 0.0
    %510 = vmatprep.subr.mxu0 0.0
    %511 = vmatpush1.msra.mxu0 0.0
    %512 = vmatprep.subr.mxu0 0.0
    %513 = vmatpush1.msra.mxu0 0.0
    %514 = vmatprep.subr.mxu0 0.0
    %515 = vmatpush1.msra.mxu0 0.0
    %516 = vmatprep.subr.mxu0 0.0
    %517 = vmatpush1.msra.mxu0 0.0
    %518 = vmatprep.subr.mxu0 0.0
    %519 = vmatpush1.msra.mxu0 0.0
    %520 = vmatprep.subr.mxu0 0.0
    %521 = vmatpush1.msra.mxu0 0.0
    %522 = vmatprep.subr.mxu0 0.0
    %523 = vmatpush1.msra.mxu0 0.0
    %524 = vmatprep.subr.mxu0 0.0
    %525 = vmatpush1.msra.mxu0 0.0
    %526 = vmatprep.subr.mxu0 0.0
    %527 = vmatpush1.msra.mxu0 0.0
    %528 = vmatprep.subr.mxu0 0.0
    %529 = vmatpush1.msra.mxu0 0.0
    %530 = vmatprep.subr.mxu0 0.0
    %531 = vmatpush1.msra.mxu0 0.0
    %532 = vmatprep.subr.mxu0 0.0
    %533 = vmatpush1.msra.mxu0 0.0
    %534 = vmatprep.subr.mxu0 0.0
    %535 = vmatpush1.msra.mxu0 0.0
    %536 = vmatprep.subr.mxu0 0.0
    %537 = vmatpush1.msra.mxu0 0.0
    %538 = vmatprep.subr.mxu0 0.0
    %539 = vmatpush1.msra.mxu0 0.0
    %540 = vmatprep.subr.mxu0 0.0
    %541 = vmatpush1.msra.mxu0 0.0
    %542 = vmatprep.subr.mxu0 0.0
    %543 = vmatpush1.msra.mxu0 0.0
    %544 = vmatprep.subr.mxu0 0.0
    %545 = vmatpush1.msra.mxu0 0.0
    %546 = vmatprep.subr.mxu0 0.0
    %547 = vmatpush1.msra.mxu0 0.0
    %548 = vmatprep.subr.mxu0 0.0
    %549 = vmatpush1.msra.mxu0 0.0
    %550 = vmatprep.subr.mxu0 0.0
    %551 = vmatpush1.msra.mxu0 0.0
    %552 = vmatprep.mubr.f32.mxu0 0.0
    %553 = vmatmul.mubr.f32.gmra.mrb[0].mxu0 %v483
    %v554 = vpop.f32.mrb[0].mxu0
    %v555 = vadd.f32 0.0, %v554
    %v556 = vpop.f32.mrb[0].mxu0
    %557 = vmatprep.mubr.f32.mxu0 0.0
    %558 = vmatmul.mubr.f32.gmra.mrb[0].mxu0 %v486
    %v559 = vpop.f32.mrb[0].mxu0
    %v560 = vadd.f32 0.0, %v559
    %v561 = vpop.f32.mrb[0].mxu0
    %562 = vdwg.mxu0
    %563 = vrot.lane.b32.xlu0 %v352, 112
    %v564 = vpop.permute.xlu0 %563
    %565 = vrot.lane.b32.xlu0 %v357, 112
    %v566 = vpop.permute.xlu0 %565
    %567 = vrot.lane.b32.xlu0 %v352, 80
    %v568 = vpop.permute.xlu0 %567
    %569 = vrot.lane.b32.xlu0 %v357, 80
    %v570 = vpop.permute.xlu0 %569
    %v571 = vsel %vm366, %v564, 0
    %v573 = vsel %vm366, %v566, 0
    %v575 = vsel %vm366, %v568, 0
    %v577 = vsel %vm366, %v570, 0
    %579 = vmatprep.subr.mxu0 0.0
    %580 = vmatpush1.xpose.msra.mxu0 %v575
    %581 = vmatprep.subr.mxu0 0.0
    %582 = vmatpush1.xpose.msra.mxu0 %v577
    %583 = vmatprep.subr.mxu0 0.0
    %584 = vmatpush1.xpose.msra.mxu0 0.0
    %585 = vmatprep.subr.mxu0 0.0
    %586 = vmatpush1.xpose.msra.mxu0 0.0
    %587 = vmatprep.subr.mxu0 0.0
    %588 = vmatpush1.xpose.msra.mxu0 0.0
    %589 = vmatprep.subr.mxu0 0.0
    %590 = vmatpush1.xpose.msra.mxu0 0.0
    %591 = vmatprep.subr.mxu0 0.0
    %592 = vmatpush1.xpose.msra.mxu0 0.0
    %593 = vmatprep.subr.mxu0 0.0
    %594 = vmatpush1.xpose.msra.mxu0 0.0
    %595 = vmatprep.subr.mxu0 0.0
    %596 = vmatpush1.xpose.msra.mxu0 0.0
    %597 = vmatprep.subr.mxu0 0.0
    %598 = vmatpush1.xpose.msra.mxu0 0.0
    %599 = vmatprep.subr.mxu0 0.0
    %600 = vmatpush1.xpose.msra.mxu0 0.0
    %601 = vmatprep.subr.mxu0 0.0
    %602 = vmatpush1.xpose.msra.mxu0 0.0
    %603 = vmatprep.subr.mxu0 0.0
    %604 = vmatpush1.xpose.msra.mxu0 0.0
    %605 = vmatprep.subr.mxu0 0.0
    %606 = vmatpush1.xpose.msra.mxu0 0.0
    %607 = vmatprep.subr.mxu0 0.0
    %608 = vmatpush1.xpose.msra.mxu0 0.0
    %609 = vmatprep.subr.mxu0 0.0
    %610 = vmatpush1.xpose.msra.mxu0 0.0
    %611 = vmatprep.subr.mxu0 0.0
    %612 = vmatpush1.xpose.msra.mxu0 0.0
    %613 = vmatprep.subr.mxu0 0.0
    %614 = vmatpush1.xpose.msra.mxu0 0.0
    %615 = vmatprep.subr.mxu0 0.0
    %616 = vmatpush1.xpose.msra.mxu0 0.0
    %617 = vmatprep.subr.mxu0 0.0
    %618 = vmatpush1.xpose.msra.mxu0 0.0
    %619 = vmatprep.subr.mxu0 0.0
    %620 = vmatpush1.xpose.msra.mxu0 0.0
    %621 = vmatprep.subr.mxu0 0.0
    %622 = vmatpush1.xpose.msra.mxu0 0.0
    %623 = vmatprep.subr.mxu0 0.0
    %624 = vmatpush1.xpose.msra.mxu0 0.0
    %625 = vmatprep.subr.mxu0 0.0
    %626 = vmatpush1.xpose.msra.mxu0 0.0
    %627 = vmatprep.subr.mxu0 0.0
    %628 = vmatpush1.xpose.msra.mxu0 0.0
    %629 = vmatprep.subr.mxu0 0.0
    %630 = vmatpush1.xpose.msra.mxu0 0.0
    %631 = vmatprep.subr.mxu0 0.0
    %632 = vmatpush1.xpose.msra.mxu0 0.0
    %633 = vmatprep.subr.mxu0 0.0
    %634 = vmatpush1.xpose.msra.mxu0 0.0
    %635 = vmatprep.subr.mxu0 0.0
    %636 = vmatpush1.xpose.msra.mxu0 0.0
    %637 = vmatprep.subr.mxu0 0.0
    %638 = vmatpush1.xpose.msra.mxu0 0.0
    %639 = vmatprep.subr.mxu0 0.0
    %640 = vmatpush1.xpose.msra.mxu0 0.0
    %641 = vmatprep.subr.mxu0 0.0
    %642 = vmatpush1.xpose.msra.mxu0 0.0
    %643 = vmatprep.mubr.f32.mxu0 0.0
    %644 = vmatmul.mubr.f32.gmra.mrb[0].mxu0 %v571
    %v645 = vpop.f32.mrb[0].mxu0
    %v646 = vadd.f32 0.0, %v645
    %v647 = vpop.f32.mrb[0].mxu0
    %648 = vmatprep.mubr.f32.mxu0 0.0
    %649 = vmatmul.mubr.f32.gmra.mrb[0].mxu0 %v573
    %v650 = vpop.f32.mrb[0].mxu0
    %v651 = vadd.f32 0.0, %v650
    %v652 = vpop.f32.mrb[0].mxu0
    %653 = vdwg.mxu0
    %v654 = vmul.f32 %v646, 0.25
    %v655 = vmul.f32 %v651, 0.25
    %v656 = vadd.f32 %v654, %v115
    %v657 = vadd.f32 %v655, %v116
    %v658 = vsel %vm366, %v656, -inf
    %659 = vmax.xlane.f32.xlu0 %v658
    %v660 = vpop.xlane.xlu0 %659
    %v661 = vsel %vm366, %v657, -inf
    %662 = vmax.xlane.f32.xlu0 %v661
    %v663 = vpop.xlane.xlu0 %662
    %v664 = vsub.f32 %v656, %v660
    %v665 = vsub.f32 %v657, %v663
    %v666 = vmul.f32 %v664, 1.442695
    %v667 = vpow.pop %v666
    %v668 = vmul.f32 %v665, 1.442695
    %v669 = vpow.pop %v668
    %v670 = vsel %vm366, %v667, 0.0
    %671 = vadd.xlane.f32.xlu0 %v670
    %v672 = vpop.xlane.xlu0 %671
    %v673 = vsel %vm366, %v669, 0.0
    %674 = vadd.xlane.f32.xlu0 %v673
    %v675 = vpop.xlane.xlu0 %674
    %v676 = vrcp.pop %v672
    %v677 = vrcp.pop %v675
    %v678 = vmul.f32 %v667, %v676
    %v679 = vmul.f32 %v669, %v677
    %680 = vrot.lane.b32.xlu0 %v352, 48
    %v681 = vpop.permute.xlu0 %680
    %682 = vrot.lane.b32.xlu0 %v357, 48
    %v683 = vpop.permute.xlu0 %682
    %v687 = vsel %vm366, %v678, 0
    %v690 = vsel %vm366, %v679, 0
    %692 = vmatprep.subr.mxu0 0.0
    %693 = vmatpush1.msra.mxu0 %v681
    %694 = vmatprep.subr.mxu0 0.0
    %695 = vmatpush1.msra.mxu0 %v683
    %696 = vmatprep.subr.mxu0 0.0
    %697 = vmatpush1.msra.mxu0 0.0
    %698 = vmatprep.subr.mxu0 0.0
    %699 = vmatpush1.msra.mxu0 0.0
    %700 = vmatprep.subr.mxu0 0.0
    %701 = vmatpush1.msra.mxu0 0.0
    %702 = vmatprep.subr.mxu0 0.0
    %703 = vmatpush1.msra.mxu0 0.0
    %704 = vmatprep.subr.mxu0 0.0
    %705 = vmatpush1.msra.mxu0 0.0
    %706 = vmatprep.subr.mxu0 0.0
    %707 = vmatpush1.msra.mxu0 0.0
    %708 = vmatprep.subr.mxu0 0.0
    %709 = vmatpush1.msra.mxu0 0.0
    %710 = vmatprep.subr.mxu0 0.0
    %711 = vmatpush1.msra.mxu0 0.0
    %712 = vmatprep.subr.mxu0 0.0
    %713 = vmatpush1.msra.mxu0 0.0
    %714 = vmatprep.subr.mxu0 0.0
    %715 = vmatpush1.msra.mxu0 0.0
    %716 = vmatprep.subr.mxu0 0.0
    %717 = vmatpush1.msra.mxu0 0.0
    %718 = vmatprep.subr.mxu0 0.0
    %719 = vmatpush1.msra.mxu0 0.0
    %720 = vmatprep.subr.mxu0 0.0
    %721 = vmatpush1.msra.mxu0 0.0
    %722 = vmatprep.subr.mxu0 0.0
    %723 = vmatpush1.msra.mxu0 0.0
    %724 = vmatprep.subr.mxu0 0.0
    %725 = vmatpush1.msra.mxu0 0.0
    %726 = vmatprep.subr.mxu0 0.0
    %727 = vmatpush1.msra.mxu0 0.0
    %728 = vmatprep.subr.mxu0 0.0
    %729 = vmatpush1.msra.mxu0 0.0
    %730 = vmatprep.subr.mxu0 0.0
    %731 = vmatpush1.msra.mxu0 0.0
    %732 = vmatprep.subr.mxu0 0.0
    %733 = vmatpush1.msra.mxu0 0.0
    %734 = vmatprep.subr.mxu0 0.0
    %735 = vmatpush1.msra.mxu0 0.0
    %736 = vmatprep.subr.mxu0 0.0
    %737 = vmatpush1.msra.mxu0 0.0
    %738 = vmatprep.subr.mxu0 0.0
    %739 = vmatpush1.msra.mxu0 0.0
    %740 = vmatprep.subr.mxu0 0.0
    %741 = vmatpush1.msra.mxu0 0.0
    %742 = vmatprep.subr.mxu0 0.0
    %743 = vmatpush1.msra.mxu0 0.0
    %744 = vmatprep.subr.mxu0 0.0
    %745 = vmatpush1.msra.mxu0 0.0
    %746 = vmatprep.subr.mxu0 0.0
    %747 = vmatpush1.msra.mxu0 0.0
    %748 = vmatprep.subr.mxu0 0.0
    %749 = vmatpush1.msra.mxu0 0.0
    %750 = vmatprep.subr.mxu0 0.0
    %751 = vmatpush1.msra.mxu0 0.0
    %752 = vmatprep.subr.mxu0 0.0
    %753 = vmatpush1.msra.mxu0 0.0
    %754 = vmatprep.subr.mxu0 0.0
    %755 = vmatpush1.msra.mxu0 0.0
    %756 = vmatprep.mubr.f32.mxu0 0.0
    %757 = vmatmul.mubr.f32.gmra.mrb[0].mxu0 %v687
    %v758 = vpop.f32.mrb[0].mxu0
    %v759 = vadd.f32 0.0, %v758
    %v760 = vpop.f32.mrb[0].mxu0
    %761 = vmatprep.mubr.f32.mxu0 0.0
    %762 = vmatmul.mubr.f32.gmra.mrb[0].mxu0 %v690
    %v763 = vpop.f32.mrb[0].mxu0
    %v764 = vadd.f32 0.0, %v763
    %v765 = vpop.f32.mrb[0].mxu0
    %766 = vdwg.mxu0
    %769 = vrot.lane.b32.xlu0 %v759, 16
    %v770 = vpop.permute.xlu0 %769
    %771 = vrot.lane.b32.xlu0 %v764, 16
    %v772 = vpop.permute.xlu0 %771
    %v775 = vsel %vm366, %v555, %v770
    %v776 = vsel %vm366, %v560, %v772
    %v777 = vlaneseq
    %v778 = vshrl.u32 %v777, 7
    %v779 = vsub.s32 4, %v778
    %v780 = vrot.slane %v57, %v779
    %785 = vrot.lane.b32.xlu0 %v67, 32
    %v786 = vpop.permute.xlu0 %785
    %787 = vrot.lane.b32.xlu0 %v70, 32
    %v788 = vpop.permute.xlu0 %787
    %789 = vrot.lane.b32.xlu0 %v73, 32
    %v790 = vpop.permute.xlu0 %789
    %791 = vrot.lane.b32.xlu0 %v76, 32
    %v792 = vpop.permute.xlu0 %791
    %v798 = vsel %vm235, %v775, 0
    %v801 = vsel %vm235, %v776, 0
    %803 = vmatprep.subr.mxu0 0.0
    %804 = vmatpush1.msra.mxu0 %v786
    %805 = vmatprep.subr.mxu0 0.0
    %806 = vmatpush1.msra.mxu0 %v788
    %807 = vmatprep.subr.mxu0 0.0
    %808 = vmatpush1.msra.mxu0 %v790
    %809 = vmatprep.subr.mxu0 0.0
    %810 = vmatpush1.msra.mxu0 %v792
    %811 = vmatprep.subr.mxu0 0.0
    %812 = vmatpush1.msra.mxu0 0.0
    %813 = vmatprep.subr.mxu0 0.0
    %814 = vmatpush1.msra.mxu0 0.0
    %815 = vmatprep.subr.mxu0 0.0
    %816 = vmatpush1.msra.mxu0 0.0
    %817 = vmatprep.subr.mxu0 0.0
    %818 = vmatpush1.msra.mxu0 0.0
    %819 = vmatprep.subr.mxu0 0.0
    %820 = vmatpush1.msra.mxu0 0.0
    %821 = vmatprep.subr.mxu0 0.0
    %822 = vmatpush1.msra.mxu0 0.0
    %823 = vmatprep.subr.mxu0 0.0
    %824 = vmatpush1.msra.mxu0 0.0
    %825 = vmatprep.subr.mxu0 0.0
    %826 = vmatpush1.msra.mxu0 0.0
    %827 = vmatprep.subr.mxu0 0.0
    %828 = vmatpush1.msra.mxu0 0.0
    %829 = vmatprep.subr.mxu0 0.0
    %830 = vmatpush1.msra.mxu0 0.0
    %831 = vmatprep.subr.mxu0 0.0
    %832 = vmatpush1.msra.mxu0 0.0
    %833 = vmatprep.subr.mxu0 0.0
    %834 = vmatpush1.msra.mxu0 0.0
    %835 = vmatprep.subr.mxu0 0.0
    %836 = vmatpush1.msra.mxu0 0.0
    %837 = vmatprep.subr.mxu0 0.0
    %838 = vmatpush1.msra.mxu0 0.0
    %839 = vmatprep.subr.mxu0 0.0
    %840 = vmatpush1.msra.mxu0 0.0
    %841 = vmatprep.subr.mxu0 0.0
    %842 = vmatpush1.msra.mxu0 0.0
    %843 = vmatprep.subr.mxu0 0.0
    %844 = vmatpush1.msra.mxu0 0.0
    %845 = vmatprep.subr.mxu0 0.0
    %846 = vmatpush1.msra.mxu0 0.0
    %847 = vmatprep.subr.mxu0 0.0
    %848 = vmatpush1.msra.mxu0 0.0
    %849 = vmatprep.subr.mxu0 0.0
    %850 = vmatpush1.msra.mxu0 0.0
    %851 = vmatprep.subr.mxu0 0.0
    %852 = vmatpush1.msra.mxu0 0.0
    %853 = vmatprep.subr.mxu0 0.0
    %854 = vmatpush1.msra.mxu0 0.0
    %855 = vmatprep.subr.mxu0 0.0
    %856 = vmatpush1.msra.mxu0 0.0
    %857 = vmatprep.subr.mxu0 0.0
    %858 = vmatpush1.msra.mxu0 0.0
    %859 = vmatprep.subr.mxu0 0.0
    %860 = vmatpush1.msra.mxu0 0.0
    %861 = vmatprep.subr.mxu0 0.0
    %862 = vmatpush1.msra.mxu0 0.0
    %863 = vmatprep.subr.mxu0 0.0
    %864 = vmatpush1.msra.mxu0 0.0
    %865 = vmatprep.subr.mxu0 0.0
    %866 = vmatpush1.msra.mxu0 0.0
    %867 = vmatprep.mubr.f32.mxu0 0.0
    %868 = vmatmul.mubr.f32.gmra.mrb[0].mxu0 %v798
    %v869 = vpop.f32.mrb[0].mxu0
    %v870 = vadd.f32 %v780, %v869
    %v871 = vpop.f32.mrb[0].mxu0
    %872 = vmatprep.mubr.f32.mxu0 0.0
    %873 = vmatmul.mubr.f32.gmra.mrb[0].mxu0 %v801
    %v874 = vpop.f32.mrb[0].mxu0
    %v875 = vadd.f32 %v780, %v874
    %v876 = vpop.f32.mrb[0].mxu0
    %877 = vdwg.mxu0
    %v878 = vadd.f32 %v273, %v870
    %v879 = vadd.f32 %v274, %v875
    %v880 = vsel %vm235, %v878, 0.0
    %881 = vadd.xlane.f32.xlu0 %v880
    %v882 = vpop.xlane.xlu0 %881
    %v883 = vsel %vm235, %v879, 0.0
    %884 = vadd.xlane.f32.xlu0 %v883
    %v885 = vpop.xlane.xlu0 %884
    %v886 = vmul.f32 %v882, %v242
    %v887 = vmul.f32 %v885, %v242
    %v888 = vsub.f32 %v878, %v886
    %v889 = vsub.f32 %v879, %v887
    %v890 = vmul.f32 %v888, %v888
    %v891 = vmul.f32 %v889, %v889
    %v892 = vsel %vm235, %v890, 0.0
    %893 = vadd.xlane.f32.xlu0 %v892
    %v894 = vpop.xlane.xlu0 %893
    %v895 = vsel %vm235, %v891, 0.0
    %896 = vadd.xlane.f32.xlu0 %v895
    %v897 = vpop.xlane.xlu0 %896
    %v898 = vmul.f32 %v894, %v242
    %v899 = vmul.f32 %v897, %v242
    %v900 = vadd.f32 %v898, 1e-12
    %v901 = vadd.f32 %v899, 1e-12
    %v902 = vrsqrt.pop %v900
    %v903 = vrsqrt.pop %v901
    %v904 = vmul.f32 %v888, %v902
    %v905 = vmul.f32 %v889, %v903
    %v906 = vlaneseq
    %v907 = vshrl.u32 %v906, 7
    %v908 = vsub.s32 5, %v907
    %v909 = vrot.slane %v57, %v908
    %v910 = vmul.f32 %v904, %v909
    %v911 = vmul.f32 %v905, %v909
    %v912 = vlaneseq
    %v913 = vshrl.u32 %v912, 7
    %v914 = vsub.s32 6, %v913
    %v915 = vrot.slane %v57, %v914
    %v916 = vadd.f32 %v910, %v915
    %v917 = vadd.f32 %v911, %v915
    %v919 = vrot.slane %v917, 7
    %vm921 = vcmask 1040384
    %v922 = vsel %vm921, %v916, %v919
    %v923 = vlaneseq
    %v924 = vshrl.u32 %v923, 7
    %v925 = vsub.s32 4, %v924
    %v926 = vrot.slane %v58, %v925
    %931 = vrot.lane.b32.xlu0 %v69, 96
    %v932 = vpop.permute.xlu0 %931
    %933 = vrot.lane.b32.xlu0 %v72, 96
    %v934 = vpop.permute.xlu0 %933
    %935 = vrot.lane.b32.xlu0 %v75, 96
    %v936 = vpop.permute.xlu0 %935
    %937 = vrot.lane.b32.xlu0 %v78, 96
    %v938 = vpop.permute.xlu0 %937
    %v944 = vsel %vm235, %v922, 0
    %946 = vmatprep.subr.mxu0 0.0
    %947 = vmatpush1.msra.mxu0 %v932
    %948 = vmatprep.subr.mxu0 0.0
    %949 = vmatpush1.msra.mxu0 %v934
    %950 = vmatprep.subr.mxu0 0.0
    %951 = vmatpush1.msra.mxu0 %v936
    %952 = vmatprep.subr.mxu0 0.0
    %953 = vmatpush1.msra.mxu0 %v938
    %954 = vmatprep.subr.mxu0 0.0
    %955 = vmatpush1.msra.mxu0 0.0
    %956 = vmatprep.subr.mxu0 0.0
    %957 = vmatpush1.msra.mxu0 0.0
    %958 = vmatprep.subr.mxu0 0.0
    %959 = vmatpush1.msra.mxu0 0.0
    %960 = vmatprep.subr.mxu0 0.0
    %961 = vmatpush1.msra.mxu0 0.0
    %962 = vmatprep.subr.mxu0 0.0
    %963 = vmatpush1.msra.mxu0 0.0
    %964 = vmatprep.subr.mxu0 0.0
    %965 = vmatpush1.msra.mxu0 0.0
    %966 = vmatprep.subr.mxu0 0.0
    %967 = vmatpush1.msra.mxu0 0.0
    %968 = vmatprep.subr.mxu0 0.0
    %969 = vmatpush1.msra.mxu0 0.0
    %970 = vmatprep.subr.mxu0 0.0
    %971 = vmatpush1.msra.mxu0 0.0
    %972 = vmatprep.subr.mxu0 0.0
    %973 = vmatpush1.msra.mxu0 0.0
    %974 = vmatprep.subr.mxu0 0.0
    %975 = vmatpush1.msra.mxu0 0.0
    %976 = vmatprep.subr.mxu0 0.0
    %977 = vmatpush1.msra.mxu0 0.0
    %978 = vmatprep.subr.mxu0 0.0
    %979 = vmatpush1.msra.mxu0 0.0
    %980 = vmatprep.subr.mxu0 0.0
    %981 = vmatpush1.msra.mxu0 0.0
    %982 = vmatprep.subr.mxu0 0.0
    %983 = vmatpush1.msra.mxu0 0.0
    %984 = vmatprep.subr.mxu0 0.0
    %985 = vmatpush1.msra.mxu0 0.0
    %986 = vmatprep.subr.mxu0 0.0
    %987 = vmatpush1.msra.mxu0 0.0
    %988 = vmatprep.subr.mxu0 0.0
    %989 = vmatpush1.msra.mxu0 0.0
    %990 = vmatprep.subr.mxu0 0.0
    %991 = vmatpush1.msra.mxu0 0.0
    %992 = vmatprep.subr.mxu0 0.0
    %993 = vmatpush1.msra.mxu0 0.0
    %994 = vmatprep.subr.mxu0 0.0
    %995 = vmatpush1.msra.mxu0 0.0
    %996 = vmatprep.subr.mxu0 0.0
    %997 = vmatpush1.msra.mxu0 0.0
    %998 = vmatprep.subr.mxu0 0.0
    %999 = vmatpush1.msra.mxu0 0.0
    %1000 = vmatprep.subr.mxu0 0.0
    %1001 = vmatpush1.msra.mxu0 0.0
    %1002 = vmatprep.subr.mxu0 0.0
    %1003 = vmatpush1.msra.mxu0 0.0
    %1004 = vmatprep.subr.mxu0 0.0
    %1005 = vmatpush1.msra.mxu0 0.0
    %1006 = vmatprep.subr.mxu0 0.0
    %1007 = vmatpush1.msra.mxu0 0.0
    %1008 = vmatprep.subr.mxu0 0.0
    %1009 = vmatpush1.msra.mxu0 0.0
    %1010 = vmatprep.mubr.f32.mxu0 0.0
    %1011 = vmatmul.mubr.f32.gmra.mrb[0].mxu0 %v944
    %v1012 = vpop.f32.mrb[0].mxu0
    %v1013 = vadd.f32 %v926, %v1012
    %v1014 = vpop.f32.mrb[0].mxu0
    %1015 = vdwg.mxu0
    %v1016 = vmul.f32 %v1013, 0.5
    %v1017 = vmul.f32 %v1013, 0.044715
    %v1018 = vmul.f32 %v1017, %v1013
    %v1019 = vmul.f32 %v1018, %v1013
    %v1020 = vadd.f32 %v1013, %v1019
    %v1021 = vmul.f32 %v1020, 0.7978846
    %v1022 = vtanh.pop %v1021
    %v1023 = vadd.f32 %v1022, 1.0
    %v1024 = vmul.f32 %v1016, %v1023
    %v1025 = vlaneseq
    %v1026 = vshrl.u32 %v1025, 7
    %v1027 = vsub.s32 7, %v1026
    %v1028 = vrot.slane %v57, %v1027
    %1037 = vrot.lane.b32.xlu0 %v59, 96
    %v1038 = vpop.permute.xlu0 %1037
    %1039 = vrot.lane.b32.xlu0 %v60, 96
    %v1040 = vpop.permute.xlu0 %1039
    %1041 = vrot.lane.b32.xlu0 %v61, 96
    %v1042 = vpop.permute.xlu0 %1041
    %1043 = vrot.lane.b32.xlu0 %v62, 96
    %v1044 = vpop.permute.xlu0 %1043
    %1045 = vrot.lane.b32.xlu0 %v63, 96
    %v1046 = vpop.permute.xlu0 %1045
    %1047 = vrot.lane.b32.xlu0 %v64, 96
    %v1048 = vpop.permute.xlu0 %1047
    %1049 = vrot.lane.b32.xlu0 %v65, 96
    %v1050 = vpop.permute.xlu0 %1049
    %1051 = vrot.lane.b32.xlu0 %v66, 96
    %v1052 = vpop.permute.xlu0 %1051
    %v1062 = vsel %vm151, %v1024, 0
    %1064 = vmatprep.subr.mxu0 0.0
    %1065 = vmatpush1.msra.mxu0 %v1038
    %1066 = vmatprep.subr.mxu0 0.0
    %1067 = vmatpush1.msra.mxu0 %v1040
    %1068 = vmatprep.subr.mxu0 0.0
    %1069 = vmatpush1.msra.mxu0 %v1042
    %1070 = vmatprep.subr.mxu0 0.0
    %1071 = vmatpush1.msra.mxu0 %v1044
    %1072 = vmatprep.subr.mxu0 0.0
    %1073 = vmatpush1.msra.mxu0 %v1046
    %1074 = vmatprep.subr.mxu0 0.0
    %1075 = vmatpush1.msra.mxu0 %v1048
    %1076 = vmatprep.subr.mxu0 0.0
    %1077 = vmatpush1.msra.mxu0 %v1050
    %1078 = vmatprep.subr.mxu0 0.0
    %1079 = vmatpush1.msra.mxu0 %v1052
    %1080 = vmatprep.subr.mxu0 0.0
    %1081 = vmatpush1.msra.mxu0 0.0
    %1082 = vmatprep.subr.mxu0 0.0
    %1083 = vmatpush1.msra.mxu0 0.0
    %1084 = vmatprep.subr.mxu0 0.0
    %1085 = vmatpush1.msra.mxu0 0.0
    %1086 = vmatprep.subr.mxu0 0.0
    %1087 = vmatpush1.msra.mxu0 0.0
    %1088 = vmatprep.subr.mxu0 0.0
    %1089 = vmatpush1.msra.mxu0 0.0
    %1090 = vmatprep.subr.mxu0 0.0
    %1091 = vmatpush1.msra.mxu0 0.0
    %1092 = vmatprep.subr.mxu0 0.0
    %1093 = vmatpush1.msra.mxu0 0.0
    %1094 = vmatprep.subr.mxu0 0.0
    %1095 = vmatpush1.msra.mxu0 0.0
    %1096 = vmatprep.subr.mxu0 0.0
    %1097 = vmatpush1.msra.mxu0 0.0
    %1098 = vmatprep.subr.mxu0 0.0
    %1099 = vmatpush1.msra.mxu0 0.0
    %1100 = vmatprep.subr.mxu0 0.0
    %1101 = vmatpush1.msra.mxu0 0.0
    %1102 = vmatprep.subr.mxu0 0.0
    %1103 = vmatpush1.msra.mxu0 0.0
    %1104 = vmatprep.subr.mxu0 0.0
    %1105 = vmatpush1.msra.mxu0 0.0
    %1106 = vmatprep.subr.mxu0 0.0
    %1107 = vmatpush1.msra.mxu0 0.0
    %1108 = vmatprep.subr.mxu0 0.0
    %1109 = vmatpush1.msra.mxu0 0.0
    %1110 = vmatprep.subr.mxu0 0.0
    %1111 = vmatpush1.msra.mxu0 0.0
    %1112 = vmatprep.subr.mxu0 0.0
    %1113 = vmatpush1.msra.mxu0 0.0
    %1114 = vmatprep.subr.mxu0 0.0
    %1115 = vmatpush1.msra.mxu0 0.0
    %1116 = vmatprep.subr.mxu0 0.0
    %1117 = vmatpush1.msra.mxu0 0.0
    %1118 = vmatprep.subr.mxu0 0.0
    %1119 = vmatpush1.msra.mxu0 0.0
    %1120 = vmatprep.subr.mxu0 0.0
    %1121 = vmatpush1.msra.mxu0 0.0
    %1122 = vmatprep.subr.mxu0 0.0
    %1123 = vmatpush1.msra.mxu0 0.0
    %1124 = vmatprep.subr.mxu0 0.0
    %1125 = vmatpush1.msra.mxu0 0.0
    %1126 = vmatprep.subr.mxu0 0.0
    %1127 = vmatpush1.msra.mxu0 0.0
    %1128 = vmatprep.mubr.f32.mxu0 0.0
    %1129 = vmatmul.mubr.f32.gmra.mrb[0].mxu0 %v1062
    %v1130 = vpop.f32.mrb[0].mxu0
    %v1131 = vadd.f32 %v1028, %v1130
    %v1132 = vpop.f32.mrb[0].mxu0
    %1133 = vdwg.mxu0
    %v1134 = vadd.f32 %v922, %v1131
    %vm1135 = vcmask 254976
    %v1136 = vsel %vm1135, %v1134, 0.0
    %1137 = vadd.xlane.f32.xlu0 %v1136
    %v1138 = vpop.xlane.xlu0 %1137
    %v1139 = vmul.f32 %v1138, %v242
    %v1140 = vsub.f32 %v1134, %v1139
    %v1141 = vmul.f32 %v1140, %v1140
    %v1142 = vsel %vm1135, %v1141, 0.0
    %1143 = vadd.xlane.f32.xlu0 %v1142
    %v1144 = vpop.xlane.xlu0 %1143
    %v1145 = vmul.f32 %v1144, %v242
    %v1146 = vadd.f32 %v1145, 1e-12
    %v1147 = vrsqrt.pop %v1146
    %v1148 = vmul.f32 %v1140, %v1147
    %v1149 = vlaneseq
    %v1150 = vshrl.u32 %v1149, 7
    %v1151 = vsub.s32 0, %v1150
    %v1152 = vrot.slane %v58, %v1151
    %v1153 = vmul.f32 %v1148, %v1152
    %v1154 = vlaneseq
    %v1155 = vshrl.u32 %v1154, 7
    %v1156 = vsub.s32 1, %v1155
    %v1157 = vrot.slane %v58, %v1156
    %v1158 = vadd.f32 %v1153, %v1157
    %v1159 = vlaneseq
    %v1160 = vshrl.u32 %v1159, 7
    %v1161 = vsub.s32 2, %v1160
    %v1162 = vrot.slane %v58, %v1161
    %v1164 = vsel %vm235, %v1158, 0
    %1166 = vmatprep.subr.mxu0 0.0
    %1167 = vmatpush1.msra.mxu0 %v69
    %1168 = vmatprep.subr.mxu0 0.0
    %1169 = vmatpush1.msra.mxu0 %v72
    %1170 = vmatprep.subr.mxu0 0.0
    %1171 = vmatpush1.msra.mxu0 %v75
    %1172 = vmatprep.subr.mxu0 0.0
    %1173 = vmatpush1.msra.mxu0 %v78
    %1174 = vmatprep.subr.mxu0 0.0
    %1175 = vmatpush1.msra.mxu0 0.0
    %1176 = vmatprep.subr.mxu0 0.0
    %1177 = vmatpush1.msra.mxu0 0.0
    %1178 = vmatprep.subr.mxu0 0.0
    %1179 = vmatpush1.msra.mxu0 0.0
    %1180 = vmatprep.subr.mxu0 0.0
    %1181 = vmatpush1.msra.mxu0 0.0
    %1182 = vmatprep.subr.mxu0 0.0
    %1183 = vmatpush1.msra.mxu0 0.0
    %1184 = vmatprep.subr.mxu0 0.0
    %1185 = vmatpush1.msra.mxu0 0.0
    %1186 = vmatprep.subr.mxu0 0.0
    %1187 = vmatpush1.msra.mxu0 0.0
    %1188 = vmatprep.subr.mxu0 0.0
    %1189 = vmatpush1.msra.mxu0 0.0
    %1190 = vmatprep.subr.mxu0 0.0
    %1191 = vmatpush1.msra.mxu0 0.0
    %1192 = vmatprep.subr.mxu0 0.0
    %1193 = vmatpush1.msra.mxu0 0.0
    %1194 = vmatprep.subr.mxu0 0.0
    %1195 = vmatpush1.msra.mxu0 0.0
    %1196 = vmatprep.subr.mxu0 0.0
    %1197 = vmatpush1.msra.mxu0 0.0
    %1198 = vmatprep.subr.mxu0 0.0
    %1199 = vmatpush1.msra.mxu0 0.0
    %1200 = vmatprep.subr.mxu0 0.0
    %1201 = vmatpush1.msra.mxu0 0.0
    %1202 = vmatprep.subr.mxu0 0.0
    %1203 = vmatpush1.msra.mxu0 0.0
    %1204 = vmatprep.subr.mxu0 0.0
    %1205 = vmatpush1.msra.mxu0 0.0
    %1206 = vmatprep.subr.mxu0 0.0
    %1207 = vmatpush1.msra.mxu0 0.0
    %1208 = vmatprep.subr.mxu0 0.0
    %1209 = vmatpush1.msra.mxu0 0.0
    %1210 = vmatprep.subr.mxu0 0.0
    %1211 = vmatpush1.msra.mxu0 0.0
    %1212 = vmatprep.subr.mxu0 0.0
    %1213 = vmatpush1.msra.mxu0 0.0
    %1214 = vmatprep.subr.mxu0 0.0
    %1215 = vmatpush1.msra.mxu0 0.0
    %1216 = vmatprep.subr.mxu0 0.0
    %1217 = vmatpush1.msra.mxu0 0.0
    %1218 = vmatprep.subr.mxu0 0.0
    %1219 = vmatpush1.msra.mxu0 0.0
    %1220 = vmatprep.subr.mxu0 0.0
    %1221 = vmatpush1.msra.mxu0 0.0
    %1222 = vmatprep.subr.mxu0 0.0
    %1223 = vmatpush1.msra.mxu0 0.0
    %1224 = vmatprep.subr.mxu0 0.0
    %1225 = vmatpush1.msra.mxu0 0.0
    %1226 = vmatprep.subr.mxu0 0.0
    %1227 = vmatpush1.msra.mxu0 0.0
    %1228 = vmatprep.subr.mxu0 0.0
    %1229 = vmatpush1.msra.mxu0 0.0
    %1230 = vmatprep.mubr.f32.mxu0 0.0
    %1231 = vmatmul.mubr.f32.gmra.mrb[0].mxu0 %v1164
    %v1232 = vpop.f32.mrb[0].mxu0
    %v1233 = vadd.f32 %v1162, %v1232
    %v1234 = vpop.f32.mrb[0].mxu0
    %1235 = vdwg.mxu0
    %v1236 = vtanh.pop %v1233
    %v1237 = vlaneseq
    %v1238 = vshrl.u32 %v1237, 7
    %v1239 = vsub.s32 5, %v1238
    %v1240 = vrot.slane %v58, %v1239
    %v1242 = vsel %vm235, %v1236, 0
    %1244 = vmatprep.subr.mxu0 0.0
    %1245 = vmatpush1.msra.mxu0 %v68
    %1246 = vmatprep.subr.mxu0 0.0
    %1247 = vmatpush1.msra.mxu0 %v71
    %1248 = vmatprep.subr.mxu0 0.0
    %1249 = vmatpush1.msra.mxu0 %v74
    %1250 = vmatprep.subr.mxu0 0.0
    %1251 = vmatpush1.msra.mxu0 %v77
    %1252 = vmatprep.subr.mxu0 0.0
    %1253 = vmatpush1.msra.mxu0 0.0
    %1254 = vmatprep.subr.mxu0 0.0
    %1255 = vmatpush1.msra.mxu0 0.0
    %1256 = vmatprep.subr.mxu0 0.0
    %1257 = vmatpush1.msra.mxu0 0.0
    %1258 = vmatprep.subr.mxu0 0.0
    %1259 = vmatpush1.msra.mxu0 0.0
    %1260 = vmatprep.subr.mxu0 0.0
    %1261 = vmatpush1.msra.mxu0 0.0
    %1262 = vmatprep.subr.mxu0 0.0
    %1263 = vmatpush1.msra.mxu0 0.0
    %1264 = vmatprep.subr.mxu0 0.0
    %1265 = vmatpush1.msra.mxu0 0.0
    %1266 = vmatprep.subr.mxu0 0.0
    %1267 = vmatpush1.msra.mxu0 0.0
    %1268 = vmatprep.subr.mxu0 0.0
    %1269 = vmatpush1.msra.mxu0 0.0
    %1270 = vmatprep.subr.mxu0 0.0
    %1271 = vmatpush1.msra.mxu0 0.0
    %1272 = vmatprep.subr.mxu0 0.0
    %1273 = vmatpush1.msra.mxu0 0.0
    %1274 = vmatprep.subr.mxu0 0.0
    %1275 = vmatpush1.msra.mxu0 0.0
    %1276 = vmatprep.subr.mxu0 0.0
    %1277 = vmatpush1.msra.mxu0 0.0
    %1278 = vmatprep.subr.mxu0 0.0
    %1279 = vmatpush1.msra.mxu0 0.0
    %1280 = vmatprep.subr.mxu0 0.0
    %1281 = vmatpush1.msra.mxu0 0.0
    %1282 = vmatprep.subr.mxu0 0.0
    %1283 = vmatpush1.msra.mxu0 0.0
    %1284 = vmatprep.subr.mxu0 0.0
    %1285 = vmatpush1.msra.mxu0 0.0
    %1286 = vmatprep.subr.mxu0 0.0
    %1287 = vmatpush1.msra.mxu0 0.0
    %1288 = vmatprep.subr.mxu0 0.0
    %1289 = vmatpush1.msra.mxu0 0.0
    %1290 = vmatprep.subr.mxu0 0.0
    %1291 = vmatpush1.msra.mxu0 0.0
    %1292 = vmatprep.subr.mxu0 0.0
    %1293 = vmatpush1.msra.mxu0 0.0
    %1294 = vmatprep.subr.mxu0 0.0
    %1295 = vmatpush1.msra.mxu0 0.0
    %1296 = vmatprep.subr.mxu0 0.0
    %1297 = vmatpush1.msra.mxu0 0.0
    %1298 = vmatprep.subr.mxu0 0.0
    %1299 = vmatpush1.msra.mxu0 0.0
    %1300 = vmatprep.subr.mxu0 0.0
    %1301 = vmatpush1.msra.mxu0 0.0
    %1302 = vmatprep.subr.mxu0 0.0
    %1303 = vmatpush1.msra.mxu0 0.0
    %1304 = vmatprep.subr.mxu0 0.0
    %1305 = vmatpush1.msra.mxu0 0.0
    %1306 = vmatprep.subr.mxu0 0.0
    %1307 = vmatpush1.msra.mxu0 0.0
    %1308 = vmatprep.mubr.f32.mxu0 0.0
    %1309 = vmatmul.mubr.f32.gmra.mrb[0].mxu0 %v1242
    %v1310 = vpop.f32.mrb[0].mxu0
    %v1311 = vadd.f32 %v1240, %v1310
    %v1312 = vpop.f32.mrb[0].mxu0
    %1313 = vdwg.mxu0
    %1314 = vst [vmem:[#allocation9] sm:$0x3] %v1311
    // Predicated region
    $region26: #{bert_classifier.1} parent=1 // pred_check
      _
    $region27: #{bert_classifier.1} parent=1 // pred_check_branch
      %1316 = sbr.rel (0) target = $region29
    $region28: #{bert_classifier.1} parent=1 // pred_region
      %s1318 = ssub.s32 32, 32
      %1319 = vsyncadd [#allocation6], %s1318
      %s1321 = sshll.u32 [#allocation9], 4
      %s1322 = int_to_ptr.vmem [resolvable:$true] %s1321
      %1324 = dma.vmem_to_hbm [thread:$0]  %s1322, 32, %s5, [#allocation6]
    $region29: #{bert_classifier.1} parent=1 // pred_fallthru
      _
    // Predicated region
    $region30: #{bert_classifier.1} parent=1 // pred_check
      _
    $region31: #{bert_classifier.1} parent=1 // pred_check_branch
      %1326 = sbr.rel (0) target = $region33
    $region32: #{bert_classifier.1} parent=1 // pred_region
      %1327 = dma.done [#allocation6], 32
    $region33: #{bert_classifier.1} parent=1 // pred_fallthru
      _
    %1328 = vsyncpa [#allocation5], 1
    %1329 = vsyncpa [#allocation8], 1
    %1330 = vsyncpa [#allocation6], 1

</llo_original>
